<compile_context>
chip_gen: v7x
topology: tpu7x:2x2x1
jax: 0.10.0
libtpu: 0.0.40
codegen_flags: <defaults>
</compile_context>

<pallas_src>
import math
from functools import partial

import jax
import jax.numpy as jnp
from jax.experimental import pallas as pl
from jax.experimental.pallas import tpu as pltpu


def _softplus(z):
    # numerically-stable softplus (matches torch.nn.functional.softplus)
    return jnp.maximum(z, 0.0) + jnp.log1p(jnp.exp(-jnp.abs(z)))


def _gelu_exact(z):
    # torch.nn.GELU() default = exact (erf) formulation
    return 0.5 * z * (1.0 + jax.lax.erf(z * 0.7071067811865476))


def mamba_block_kernel(Bt, L, H, N, Tc,
                       x_ref, ln_w_ref, ln_b_ref,
                       wproj_ref, bd_ref, A_ref, D_ref,
                       wga_ref, bga_ref, wgb_ref, bgb_ref,
                       o_ref,
                       xn_s, dlt_s, B_s, C_s, y_s):
    x = x_ref[...]                                                  # (Bt, L, H)

    # ---- LayerNorm(hidden_dim), eps=1e-5, affine ----
    mu = jnp.mean(x, axis=-1, keepdims=True)
    xc = x - mu
    var = jnp.mean(xc * xc, axis=-1, keepdims=True)
    xn = xc * jax.lax.rsqrt(var + 1e-5) * ln_w_ref[...] + ln_b_ref[...]
    xn_s[...] = xn

    # ---- fused delta/B/C projections: one MXU pass over (Bt*L, H) ----
    # TODO(synk): S6Layer source was not provided; canonical selective scan
    # (softplus delta, ZOH-discretized diagonal A, B/C projections, D skip).
    xn2 = xn.reshape(Bt * L, H)
    proj = jnp.dot(xn2.astype(wproj_ref.dtype), wproj_ref[...],
                   preferred_element_type=jnp.float32)              # (Bt*L, H+2N)
    delta = _softplus(proj[:, :H] + bd_ref[...])                    # (Bt*L, H)
    dlt_s[...] = delta.reshape(Bt, L, H)
    B_s[...] = proj[:, H:H + N].reshape(Bt, L, N)
    C_s[...] = proj[:, H + N:H + 2 * N].reshape(Bt, L, N)

    # A stored transposed (N, H): H in the lane dim -> lane-dense recurrence.
    A_b = A_ref[...][None, :, :]                                    # (1, N, H)

    def chunk_body(c, h):                                           # h: (Bt, N, H)
        t0 = pl.multiple_of(c * Tc, Tc)
        d_c = dlt_s[:, pl.ds(t0, Tc), :]                            # (Bt, Tc, H)
        x_c = xn_s[:, pl.ds(t0, Tc), :]                             # (Bt, Tc, H)
        b_c = B_s[:, pl.ds(t0, Tc), :]                              # (Bt, Tc, N)
        c_c = C_s[:, pl.ds(t0, Tc), :]                              # (Bt, Tc, N)
        for i in range(Tc):                                         # fixed inner unroll
            d_t = d_c[:, i, :]                                      # (Bt, H)
            dA = jnp.exp(d_t[:, None, :] * A_b)                     # (Bt, N, H)
            dBx = b_c[:, i, :][:, :, None] * (d_t * x_c[:, i, :])[:, None, :]
            h = dA * h + dBx                                        # (Bt, N, H)
            y_t = jnp.sum(h * c_c[:, i, :][:, :, None], axis=1)     # (Bt, H)
            y_s[:, pl.ds(t0 + i, 1), :] = y_t[:, None, :]           # one y store / step
        return h

    h0 = jnp.zeros((Bt, N, H), jnp.float32)
    jax.lax.fori_loop(0, L // Tc, chunk_body, h0)

    # ---- D skip + GELU (dropout(0.1) is identity at inference) ----
    # TODO(synk): torch Dropout not modeled (eval-mode identity).
    y = y_s[...] + D_ref[...] * xn_s[...]                           # (Bt, L, H)
    y = _gelu_exact(y)

    # ---- GLU: two (H, H) matmuls, a * sigmoid(b), no output slicing ----
    y2 = y.reshape(Bt * L, H).astype(wga_ref.dtype)
    a = jnp.dot(y2, wga_ref[...], preferred_element_type=jnp.float32) + bga_ref[...]
    b = jnp.dot(y2, wgb_ref[...], preferred_element_type=jnp.float32) + bgb_ref[...]
    out = a * jax.nn.sigmoid(b)                                     # (Bt*L, H)

    # ---- residual ----
    o_ref[...] = (out.reshape(Bt, L, H) + x_ref[...]).astype(o_ref.dtype)


def mamba_block(x, params, *, bt=None, matmul_dtype=jnp.float32):
    B, L, H = x.shape
    N = params["A"].shape[1]

    # batch tile: make the projection/GLU matmul M-dim (bt*L) reasonably large
    # while keeping bt | B.  Realistic L (>=128) -> bt=1 and grid=(B,).
    if bt is None:
        bt = min(B, max(1, -(-128 // L)))
    while B % bt:
        bt -= 1
    # sequence chunk length for the scan (inner unroll)
    tc = next(t for t in (8, 4, 2, 1) if L % t == 0)

    # wrapper-side weight re-layout (layout plumbing, done once under jit)
    w_proj = jnp.concatenate(
        [params["wd"], params["wB"], params["wC"]], axis=1).astype(matmul_dtype)   # (H, H+2N)
    a_t = jnp.transpose(params["A"])                                # (N, H): H in lanes
    wg_a = params["wg"][:, :H].astype(matmul_dtype)
    wg_b = params["wg"][:, H:].astype(matmul_dtype)
    bg_a = params["bg"][:, :H]
    bg_b = params["bg"][:, H:]

    kernel = partial(mamba_block_kernel, bt, L, H, N, tc)

    def const(shape):
        n = len(shape)
        return pl.BlockSpec(shape, lambda b: (0,) * n)

    flops = 2 * B * L * H * (H + 2 * N) + 4 * B * L * H * H + 8 * B * L * N * H
    transc = B * L * (N * H + 4 * H)
    bytes_acc = 4 * (2 * B * L * H + H * (H + 2 * N) + 2 * H * H + N * H + 8 * H)

    return pl.pallas_call(
        kernel,
        out_shape=jax.ShapeDtypeStruct((B, L, H), x.dtype),
        grid_spec=pltpu.PrefetchScalarGridSpec(
            num_scalar_prefetch=0,
            grid=(B // bt,),
            in_specs=[
                pl.BlockSpec((bt, L, H), lambda b: (b, 0, 0)),   # x
                const((1, H)),           # layernorm weight
                const((1, H)),           # layernorm bias
                const((H, H + 2 * N)),   # fused [W_delta | W_B | W_C]
                const((1, H)),           # b_delta
                const((N, H)),           # A^T (diagonal SSM matrix, H in lanes)
                const((1, H)),           # D (skip)
                const((H, H)),           # GLU weight (value half)
                const((1, H)),           # GLU bias   (value half)
                const((H, H)),           # GLU weight (gate half)
                const((1, H)),           # GLU bias   (gate half)
            ],
            out_specs=pl.BlockSpec((bt, L, H), lambda b: (b, 0, 0)),
            scratch_shapes=[
                pltpu.VMEM((bt, L, H), jnp.float32),   # xn
                pltpu.VMEM((bt, L, H), jnp.float32),   # delta
                pltpu.VMEM((bt, L, N), jnp.float32),   # B(t)
                pltpu.VMEM((bt, L, N), jnp.float32),   # C(t)
                pltpu.VMEM((bt, L, H), jnp.float32),   # scan output y
            ]),
        compiler_params=pltpu.CompilerParams(
            dimension_semantics=("parallel",),          # batch steps independent
            vmem_limit_bytes=48 * 1024 * 1024),         # headroom under v7x 64 MiB
        cost_estimate=pl.CostEstimate(flops=flops, transcendentals=transc,
                                      bytes_accessed=bytes_acc),
    )(x, params["ln_w"], params["ln_b"], w_proj, params["bd"],
      a_t, params["D"], wg_a, bg_a, wg_b, bg_b)


def mamba_block_ref(x, params):
    """Pure-JAX reference with identical math (for verification)."""
    B, L, H = x.shape
    mu = jnp.mean(x, axis=-1, keepdims=True)
    var = jnp.mean((x - mu) ** 2, axis=-1, keepdims=True)
    xn = (x - mu) * jax.lax.rsqrt(var + 1e-5) * params["ln_w"] + params["ln_b"]

    delta = _softplus(xn @ params["wd"] + params["bd"])          # (B, L, H)
    Bm = xn @ params["wB"]                                       # (B, L, N)
    Cm = xn @ params["wC"]                                       # (B, L, N)
    dA = jnp.exp(delta[..., None] * params["A"][None, None])     # (B, L, H, N)
    dBx = (delta * xn)[..., None] * Bm[:, :, None, :]            # (B, L, H, N)

    N = params["A"].shape[1]
    h = jnp.zeros((B, H, N), jnp.float32)
    ys = []
    for t in range(L):
        h = dA[:, t] * h + dBx[:, t]
        ys.append(jnp.sum(h * Cm[:, t, None, :], axis=-1))
    y = jnp.stack(ys, axis=1) + params["D"] * xn                 # (B, L, H)

    y = _gelu_exact(y)
    g = y @ params["wg"] + params["bg"]
    out = g[..., :H] * jax.nn.sigmoid(g[..., H:])
    return out + x


def make_params(H, N, key):
    ks = jax.random.split(key, 6)
    s = 1.0 / math.sqrt(H)
    return {
        "ln_w": jnp.ones((1, H), jnp.float32),
        "ln_b": jnp.zeros((1, H), jnp.float32),
        "wd": jax.random.normal(ks[0], (H, H), jnp.float32) * s,
        "bd": jax.random.normal(ks[1], (1, H), jnp.float32) * 0.01,
        "wB": jax.random.normal(ks[2], (H, N), jnp.float32) * s,
        "wC": jax.random.normal(ks[3], (H, N), jnp.float32) * s,
        "A": -jnp.broadcast_to(jnp.arange(1, N + 1, dtype=jnp.float32), (H, N)) / N,
        "D": jnp.full((1, H), 0.5, jnp.float32),
        "wg": jax.random.normal(ks[4], (H, 2 * H), jnp.float32) * s,
        "bg": jax.random.normal(ks[5], (1, 2 * H), jnp.float32) * 0.01,
    }


if __name__ == "__main__":
    B, L, H, N = 2, 8, 32, 8    # batch, seq, hidden_dim, state_dim
    key = jax.random.PRNGKey(0)
    kx, kp = jax.random.split(key)
    x = jax.random.normal(kx, (B, L, H), jnp.float32)
    params = make_params(H, N, kp)

    out = mamba_block(x, params)
    out = jax.block_until_ready(out)

    ref = jax.block_until_ready(mamba_block_ref(x, params))
    assert out.shape == (B, L, H)
    assert bool(jnp.all(jnp.isfinite(out)))
    assert bool(jnp.allclose(out, ref, rtol=1e-2, atol=1e-2)), "mismatch vs reference"

    print("KERNEL_OK")
</pallas_src>

<mosaic_0001>
module attributes {stable_mosaic.version = 11 : i64} {
  func.func @mamba_block_kernel(%arg0: i32, %arg1: memref<2x8x32xf32, #tpu.memory_space<vmem>>, %arg2: memref<1x32xf32, #tpu.memory_space<vmem>>, %arg3: memref<1x32xf32, #tpu.memory_space<vmem>>, %arg4: memref<32x48xf32, #tpu.memory_space<vmem>>, %arg5: memref<1x32xf32, #tpu.memory_space<vmem>>, %arg6: memref<8x32xf32, #tpu.memory_space<vmem>>, %arg7: memref<1x32xf32, #tpu.memory_space<vmem>>, %arg8: memref<32x32xf32, #tpu.memory_space<vmem>>, %arg9: memref<1x32xf32, #tpu.memory_space<vmem>>, %arg10: memref<32x32xf32, #tpu.memory_space<vmem>>, %arg11: memref<1x32xf32, #tpu.memory_space<vmem>>, %arg12: memref<2x8x32xf32, #tpu.memory_space<vmem>>, %arg13: memref<2x8x32xf32, #tpu.memory_space<vmem>>, %arg14: memref<2x8x32xf32, #tpu.memory_space<vmem>>, %arg15: memref<2x8x8xf32, #tpu.memory_space<vmem>>, %arg16: memref<2x8x8xf32, #tpu.memory_space<vmem>>, %arg17: memref<2x8x32xf32, #tpu.memory_space<vmem>>) attributes {dimension_semantics = [#tpu.dimension_semantics<parallel>], iteration_bounds = array<i64: 1>, scalar_prefetch = 0 : i64, scratch_operands = 5 : i64, tpu.core_type = #tpu.core_type<tc>, window_params = [{transform_indices = @transform_0, window_bounds = array<i64: 2, 8, 32>}, {pipeline_mode = #tpu.pipeline_mode<synchronous>, transform_indices = @transform_1, window_bounds = array<i64: 1, 32>}, {pipeline_mode = #tpu.pipeline_mode<synchronous>, transform_indices = @transform_2, window_bounds = array<i64: 1, 32>}, {pipeline_mode = #tpu.pipeline_mode<synchronous>, transform_indices = @transform_3, window_bounds = array<i64: 32, 48>}, {pipeline_mode = #tpu.pipeline_mode<synchronous>, transform_indices = @transform_4, window_bounds = array<i64: 1, 32>}, {pipeline_mode = #tpu.pipeline_mode<synchronous>, transform_indices = @transform_5, window_bounds = array<i64: 8, 32>}, {pipeline_mode = #tpu.pipeline_mode<synchronous>, transform_indices = @transform_6, window_bounds = array<i64: 1, 32>}, {pipeline_mode = #tpu.pipeline_mode<synchronous>, transform_indices = @transform_7, window_bounds = array<i64: 32, 32>}, {pipeline_mode = #tpu.pipeline_mode<synchronous>, transform_indices = @transform_8, window_bounds = array<i64: 1, 32>}, {pipeline_mode = #tpu.pipeline_mode<synchronous>, transform_indices = @transform_9, window_bounds = array<i64: 32, 32>}, {pipeline_mode = #tpu.pipeline_mode<synchronous>, transform_indices = @transform_10, window_bounds = array<i64: 1, 32>}, {transform_indices = @transform_11, window_bounds = array<i64: 2, 8, 32>}]} {
    %c0 = arith.constant 0 : index
    %c0_0 = arith.constant 0 : index
    %c0_1 = arith.constant 0 : index
    %0 = vector.load %arg1[%c0, %c0_0, %c0_1] : memref<2x8x32xf32, #tpu.memory_space<vmem>>, vector<2x8x32xf32>
    %cst = arith.constant dense<0.000000e+00> : vector<2x8xf32>
    %1 = vector.multi_reduction <add>, %0, %cst [2] : vector<2x8x32xf32> to vector<2x8xf32>
    %2 = vector.shape_cast %1 : vector<2x8xf32> to vector<2x8x1xf32>
    %cst_2 = arith.constant 3.200000e+01 : f32
    %3 = vector.broadcast %cst_2 : f32 to vector<2x8x1xf32>
    %4 = arith.divf %2, %3 : vector<2x8x1xf32>
    %5 = vector.broadcast %4 : vector<2x8x1xf32> to vector<2x8x32xf32>
    %6 = arith.subf %0, %5 : vector<2x8x32xf32>
    %7 = arith.mulf %6, %6 : vector<2x8x32xf32>
    %cst_3 = arith.constant dense<0.000000e+00> : vector<2x8xf32>
    %8 = vector.multi_reduction <add>, %7, %cst_3 [2] : vector<2x8x32xf32> to vector<2x8xf32>
    %9 = vector.shape_cast %8 : vector<2x8xf32> to vector<2x8x1xf32>
    %cst_4 = arith.constant 3.200000e+01 : f32
    %10 = vector.broadcast %cst_4 : f32 to vector<2x8x1xf32>
    %11 = arith.divf %9, %10 : vector<2x8x1xf32>
    %cst_5 = arith.constant 9.99999974E-6 : f32
    %12 = vector.broadcast %cst_5 : f32 to vector<2x8x1xf32>
    %13 = arith.addf %11, %12 : vector<2x8x1xf32>
    %14 = math.rsqrt %13 : vector<2x8x1xf32>
    %15 = vector.broadcast %14 : vector<2x8x1xf32> to vector<2x8x32xf32>
    %16 = arith.mulf %6, %15 : vector<2x8x32xf32>
    %c0_6 = arith.constant 0 : index
    %c0_7 = arith.constant 0 : index
    %17 = vector.load %arg2[%c0_6, %c0_7] : memref<1x32xf32, #tpu.memory_space<vmem>>, vector<1x32xf32>
    %18 = vector.shape_cast %17 : vector<1x32xf32> to vector<1x1x32xf32>
    %19 = vector.broadcast %18 : vector<1x1x32xf32> to vector<2x8x32xf32>
    %20 = arith.mulf %16, %19 : vector<2x8x32xf32>
    %c0_8 = arith.constant 0 : index
    %c0_9 = arith.constant 0 : index
    %21 = vector.load %arg3[%c0_8, %c0_9] : memref<1x32xf32, #tpu.memory_space<vmem>>, vector<1x32xf32>
    %22 = vector.shape_cast %21 : vector<1x32xf32> to vector<1x1x32xf32>
    %23 = vector.broadcast %22 : vector<1x1x32xf32> to vector<2x8x32xf32>
    %24 = arith.addf %20, %23 : vector<2x8x32xf32>
    %c0_10 = arith.constant 0 : index
    %c0_11 = arith.constant 0 : index
    %c0_12 = arith.constant 0 : index
    %25 = vector.load %arg13[%c0_10, %c0_11, %c0_12] : memref<2x8x32xf32, #tpu.memory_space<vmem>>, vector<2x8x32xf32>
    tpu.vector_store %arg13[%c0_10, %c0_11, %c0_12], %24 {strides = array<i32>} : memref<2x8x32xf32, #tpu.memory_space<vmem>>, vector<2x8x32xf32>,
    %26 = vector.shape_cast %24 : vector<2x8x32xf32> to vector<16x32xf32>
    %c0_13 = arith.constant 0 : index
    %c0_14 = arith.constant 0 : index
    %27 = vector.load %arg4[%c0_13, %c0_14] : memref<32x48xf32, #tpu.memory_space<vmem>>, vector<32x48xf32>
    %cst_15 = arith.constant dense<0.000000e+00> : vector<16x48xf32>
    %28 = tpu.matmul %26, %27, %cst_15 {dimension_numbers = #tpu.dot_dimension_numbers<[1], [0], [0], [1], [0, 0, 1, 1], [], []>} : vector<16x32xf32>, vector<32x48xf32>, vector<16x48xf32> -> vector<16x48xf32>
    %29 = vector.extract_strided_slice %28 {offsets = [0, 0], sizes = [16, 32], strides = [1, 1]} : vector<16x48xf32> to vector<16x32xf32>
    %c0_16 = arith.constant 0 : index
    %c0_17 = arith.constant 0 : index
    %30 = vector.load %arg5[%c0_16, %c0_17] : memref<1x32xf32, #tpu.memory_space<vmem>>, vector<1x32xf32>
    %31 = vector.broadcast %30 : vector<1x32xf32> to vector<16x32xf32>
    %32 = arith.addf %29, %31 : vector<16x32xf32>
    %cst_18 = arith.constant 0.000000e+00 : f32
    %33 = vector.broadcast %cst_18 : f32 to vector<16x32xf32>
    %34 = arith.maximumf %32, %33 : vector<16x32xf32>
    %35 = math.absf %32 : vector<16x32xf32>
    %cst_19 = arith.constant 0.000000e+00 : f32
    %36 = vector.broadcast %cst_19 : f32 to vector<16x32xf32>
    %37 = arith.subf %36, %35 : vector<16x32xf32>
    %38 = math.exp %37 : vector<16x32xf32>
    %39 = math.log1p %38 : vector<16x32xf32>
    %40 = arith.addf %34, %39 : vector<16x32xf32>
    %41 = vector.shape_cast %40 : vector<16x32xf32> to vector<2x8x32xf32>
    %c0_20 = arith.constant 0 : index
    %c0_21 = arith.constant 0 : index
    %c0_22 = arith.constant 0 : index
    %42 = vector.load %arg14[%c0_20, %c0_21, %c0_22] : memref<2x8x32xf32, #tpu.memory_space<vmem>>, vector<2x8x32xf32>
    tpu.vector_store %arg14[%c0_20, %c0_21, %c0_22], %41 {strides = array<i32>} : memref<2x8x32xf32, #tpu.memory_space<vmem>>, vector<2x8x32xf32>,
    %43 = vector.extract_strided_slice %28 {offsets = [0, 32], sizes = [16, 8], strides = [1, 1]} : vector<16x48xf32> to vector<16x8xf32>
    %44 = vector.shape_cast %43 : vector<16x8xf32> to vector<2x8x8xf32>
    %c0_23 = arith.constant 0 : index
    %c0_24 = arith.constant 0 : index
    %c0_25 = arith.constant 0 : index
    %45 = vector.load %arg15[%c0_23, %c0_24, %c0_25] : memref<2x8x8xf32, #tpu.memory_space<vmem>>, vector<2x8x8xf32>
    tpu.vector_store %arg15[%c0_23, %c0_24, %c0_25], %44 {strides = array<i32>} : memref<2x8x8xf32, #tpu.memory_space<vmem>>, vector<2x8x8xf32>,
    %46 = vector.extract_strided_slice %28 {offsets = [0, 40], sizes = [16, 8], strides = [1, 1]} : vector<16x48xf32> to vector<16x8xf32>
    %47 = vector.shape_cast %46 : vector<16x8xf32> to vector<2x8x8xf32>
    %c0_26 = arith.constant 0 : index
    %c0_27 = arith.constant 0 : index
    %c0_28 = arith.constant 0 : index
    %48 = vector.load %arg16[%c0_26, %c0_27, %c0_28] : memref<2x8x8xf32, #tpu.memory_space<vmem>>, vector<2x8x8xf32>
    tpu.vector_store %arg16[%c0_26, %c0_27, %c0_28], %47 {strides = array<i32>} : memref<2x8x8xf32, #tpu.memory_space<vmem>>, vector<2x8x8xf32>,
    %c0_29 = arith.constant 0 : index
    %c0_30 = arith.constant 0 : index
    %49 = vector.load %arg6[%c0_29, %c0_30] : memref<8x32xf32, #tpu.memory_space<vmem>>, vector<8x32xf32>
    %50 = vector.shape_cast %49 : vector<8x32xf32> to vector<1x8x32xf32>
    %cst_31 = arith.constant 0.000000e+00 : f32
    %51 = vector.broadcast %cst_31 : f32 to vector<2x8x32xf32>
    %c0_i32 = arith.constant 0 : i32
    %c8_i32 = arith.constant 8 : i32
    %52 = arith.muli %c0_i32, %c8_i32 : i32
    %53 = tpu.assume_multiple %52, 8 : i32
    %c0_32 = arith.constant 0 : index
    %54 = arith.index_cast %53 : i32 to index
    %c0_33 = arith.constant 0 : index
    %55 = vector.load %arg14[%c0_32, %54, %c0_33] : memref<2x8x32xf32, #tpu.memory_space<vmem>>, vector<2x8x32xf32>
    %c0_34 = arith.constant 0 : index
    %56 = arith.index_cast %53 : i32 to index
    %c0_35 = arith.constant 0 : index
    %57 = vector.load %arg13[%c0_34, %56, %c0_35] : memref<2x8x32xf32, #tpu.memory_space<vmem>>, vector<2x8x32xf32>
    %c0_36 = arith.constant 0 : index
    %58 = arith.index_cast %53 : i32 to index
    %c0_37 = arith.constant 0 : index
    %59 = vector.load %arg15[%c0_36, %58, %c0_37] : memref<2x8x8xf32, #tpu.memory_space<vmem>>, vector<2x8x8xf32>
    %c0_38 = arith.constant 0 : index
    %60 = arith.index_cast %53 : i32 to index
    %c0_39 = arith.constant 0 : index
    %61 = vector.load %arg16[%c0_38, %60, %c0_39] : memref<2x8x8xf32, #tpu.memory_space<vmem>>, vector<2x8x8xf32>
    %62 = vector.extract_strided_slice %55 {offsets = [0, 0, 0], sizes = [2, 1, 32], strides = [1, 1, 1]} : vector<2x8x32xf32> to vector<2x1x32xf32>
    %63 = vector.shape_cast %62 : vector<2x1x32xf32> to vector<2x32xf32>
    %64 = vector.shape_cast %63 : vector<2x32xf32> to vector<2x1x32xf32>
    %65 = vector.broadcast %64 : vector<2x1x32xf32> to vector<2x8x32xf32>
    %66 = vector.broadcast %50 : vector<1x8x32xf32> to vector<2x8x32xf32>
    %67 = arith.mulf %65, %66 : vector<2x8x32xf32>
    %68 = math.exp %67 : vector<2x8x32xf32>
    %69 = vector.extract_strided_slice %59 {offsets = [0, 0, 0], sizes = [2, 1, 8], strides = [1, 1, 1]} : vector<2x8x8xf32> to vector<2x1x8xf32>
    %70 = vector.shape_cast %69 : vector<2x1x8xf32> to vector<2x8xf32>
    %71 = vector.shape_cast %70 : vector<2x8xf32> to vector<2x8x1xf32>
    %72 = vector.extract_strided_slice %57 {offsets = [0, 0, 0], sizes = [2, 1, 32], strides = [1, 1, 1]} : vector<2x8x32xf32> to vector<2x1x32xf32>
    %73 = vector.shape_cast %72 : vector<2x1x32xf32> to vector<2x32xf32>
    %74 = arith.mulf %63, %73 : vector<2x32xf32>
    %75 = vector.shape_cast %74 : vector<2x32xf32> to vector<2x1x32xf32>
    %76 = vector.broadcast %71 : vector<2x8x1xf32> to vector<2x8x32xf32>
    %77 = vector.broadcast %75 : vector<2x1x32xf32> to vector<2x8x32xf32>
    %78 = arith.mulf %76, %77 : vector<2x8x32xf32>
    %79 = arith.mulf %68, %51 : vector<2x8x32xf32>
    %80 = arith.addf %79, %78 : vector<2x8x32xf32>
    %81 = vector.extract_strided_slice %61 {offsets = [0, 0, 0], sizes = [2, 1, 8], strides = [1, 1, 1]} : vector<2x8x8xf32> to vector<2x1x8xf32>
    %82 = vector.shape_cast %81 : vector<2x1x8xf32> to vector<2x8xf32>
    %83 = vector.shape_cast %82 : vector<2x8xf32> to vector<2x8x1xf32>
    %84 = vector.broadcast %83 : vector<2x8x1xf32> to vector<2x8x32xf32>
    %85 = arith.mulf %80, %84 : vector<2x8x32xf32>
    %cst_40 = arith.constant dense<0.000000e+00> : vector<2x32xf32>
    %86 = vector.multi_reduction <add>, %85, %cst_40 [1] : vector<2x8x32xf32> to vector<2x32xf32>
    %87 = vector.shape_cast %86 : vector<2x32xf32> to vector<2x1x32xf32>
    %c0_i32_41 = arith.constant 0 : i32
    %88 = arith.addi %53, %c0_i32_41 : i32
    %c0_42 = arith.constant 0 : index
    %89 = arith.index_cast %88 : i32 to index
    %c0_43 = arith.constant 0 : index
    %90 = vector.load %arg17[%c0_42, %89, %c0_43] : memref<2x8x32xf32, #tpu.memory_space<vmem>>, vector<2x1x32xf32>
    tpu.vector_store %arg17[%c0_42, %89, %c0_43], %87 {strides = array<i32>} : memref<2x8x32xf32, #tpu.memory_space<vmem>>, vector<2x1x32xf32>,
    %91 = vector.extract_strided_slice %55 {offsets = [0, 1, 0], sizes = [2, 1, 32], strides = [1, 1, 1]} : vector<2x8x32xf32> to vector<2x1x32xf32>
    %92 = vector.shape_cast %91 : vector<2x1x32xf32> to vector<2x32xf32>
    %93 = vector.shape_cast %92 : vector<2x32xf32> to vector<2x1x32xf32>
    %94 = vector.broadcast %93 : vector<2x1x32xf32> to vector<2x8x32xf32>
    %95 = vector.broadcast %50 : vector<1x8x32xf32> to vector<2x8x32xf32>
    %96 = arith.mulf %94, %95 : vector<2x8x32xf32>
    %97 = math.exp %96 : vector<2x8x32xf32>
    %98 = vector.extract_strided_slice %59 {offsets = [0, 1, 0], sizes = [2, 1, 8], strides = [1, 1, 1]} : vector<2x8x8xf32> to vector<2x1x8xf32>
    %99 = vector.shape_cast %98 : vector<2x1x8xf32> to vector<2x8xf32>
    %100 = vector.shape_cast %99 : vector<2x8xf32> to vector<2x8x1xf32>
    %101 = vector.extract_strided_slice %57 {offsets = [0, 1, 0], sizes = [2, 1, 32], strides = [1, 1, 1]} : vector<2x8x32xf32> to vector<2x1x32xf32>
    %102 = vector.shape_cast %101 : vector<2x1x32xf32> to vector<2x32xf32>
    %103 = arith.mulf %92, %102 : vector<2x32xf32>
    %104 = vector.shape_cast %103 : vector<2x32xf32> to vector<2x1x32xf32>
    %105 = vector.broadcast %100 : vector<2x8x1xf32> to vector<2x8x32xf32>
    %106 = vector.broadcast %104 : vector<2x1x32xf32> to vector<2x8x32xf32>
    %107 = arith.mulf %105, %106 : vector<2x8x32xf32>
    %108 = arith.mulf %97, %80 : vector<2x8x32xf32>
    %109 = arith.addf %108, %107 : vector<2x8x32xf32>
    %110 = vector.extract_strided_slice %61 {offsets = [0, 1, 0], sizes = [2, 1, 8], strides = [1, 1, 1]} : vector<2x8x8xf32> to vector<2x1x8xf32>
    %111 = vector.shape_cast %110 : vector<2x1x8xf32> to vector<2x8xf32>
    %112 = vector.shape_cast %111 : vector<2x8xf32> to vector<2x8x1xf32>
    %113 = vector.broadcast %112 : vector<2x8x1xf32> to vector<2x8x32xf32>
    %114 = arith.mulf %109, %113 : vector<2x8x32xf32>
    %cst_44 = arith.constant dense<0.000000e+00> : vector<2x32xf32>
    %115 = vector.multi_reduction <add>, %114, %cst_44 [1] : vector<2x8x32xf32> to vector<2x32xf32>
    %116 = vector.shape_cast %115 : vector<2x32xf32> to vector<2x1x32xf32>
    %c1_i32 = arith.constant 1 : i32
    %117 = arith.addi %53, %c1_i32 : i32
    %c0_45 = arith.constant 0 : index
    %118 = arith.index_cast %117 : i32 to index
    %c0_46 = arith.constant 0 : index
    %119 = vector.load %arg17[%c0_45, %118, %c0_46] : memref<2x8x32xf32, #tpu.memory_space<vmem>>, vector<2x1x32xf32>
    tpu.vector_store %arg17[%c0_45, %118, %c0_46], %116 {strides = array<i32>} : memref<2x8x32xf32, #tpu.memory_space<vmem>>, vector<2x1x32xf32>,
    %120 = vector.extract_strided_slice %55 {offsets = [0, 2, 0], sizes = [2, 1, 32], strides = [1, 1, 1]} : vector<2x8x32xf32> to vector<2x1x32xf32>
    %121 = vector.shape_cast %120 : vector<2x1x32xf32> to vector<2x32xf32>
    %122 = vector.shape_cast %121 : vector<2x32xf32> to vector<2x1x32xf32>
    %123 = vector.broadcast %122 : vector<2x1x32xf32> to vector<2x8x32xf32>
    %124 = vector.broadcast %50 : vector<1x8x32xf32> to vector<2x8x32xf32>
    %125 = arith.mulf %123, %124 : vector<2x8x32xf32>
    %126 = math.exp %125 : vector<2x8x32xf32>
    %127 = vector.extract_strided_slice %59 {offsets = [0, 2, 0], sizes = [2, 1, 8], strides = [1, 1, 1]} : vector<2x8x8xf32> to vector<2x1x8xf32>
    %128 = vector.shape_cast %127 : vector<2x1x8xf32> to vector<2x8xf32>
    %129 = vector.shape_cast %128 : vector<2x8xf32> to vector<2x8x1xf32>
    %130 = vector.extract_strided_slice %57 {offsets = [0, 2, 0], sizes = [2, 1, 32], strides = [1, 1, 1]} : vector<2x8x32xf32> to vector<2x1x32xf32>
    %131 = vector.shape_cast %130 : vector<2x1x32xf32> to vector<2x32xf32>
    %132 = arith.mulf %121, %131 : vector<2x32xf32>
    %133 = vector.shape_cast %132 : vector<2x32xf32> to vector<2x1x32xf32>
    %134 = vector.broadcast %129 : vector<2x8x1xf32> to vector<2x8x32xf32>
    %135 = vector.broadcast %133 : vector<2x1x32xf32> to vector<2x8x32xf32>
    %136 = arith.mulf %134, %135 : vector<2x8x32xf32>
    %137 = arith.mulf %126, %109 : vector<2x8x32xf32>
    %138 = arith.addf %137, %136 : vector<2x8x32xf32>
    %139 = vector.extract_strided_slice %61 {offsets = [0, 2, 0], sizes = [2, 1, 8], strides = [1, 1, 1]} : vector<2x8x8xf32> to vector<2x1x8xf32>
    %140 = vector.shape_cast %139 : vector<2x1x8xf32> to vector<2x8xf32>
    %141 = vector.shape_cast %140 : vector<2x8xf32> to vector<2x8x1xf32>
    %142 = vector.broadcast %141 : vector<2x8x1xf32> to vector<2x8x32xf32>
    %143 = arith.mulf %138, %142 : vector<2x8x32xf32>
    %cst_47 = arith.constant dense<0.000000e+00> : vector<2x32xf32>
    %144 = vector.multi_reduction <add>, %143, %cst_47 [1] : vector<2x8x32xf32> to vector<2x32xf32>
    %145 = vector.shape_cast %144 : vector<2x32xf32> to vector<2x1x32xf32>
    %c2_i32 = arith.constant 2 : i32
    %146 = arith.addi %53, %c2_i32 : i32
    %c0_48 = arith.constant 0 : index
    %147 = arith.index_cast %146 : i32 to index
    %c0_49 = arith.constant 0 : index
    %148 = vector.load %arg17[%c0_48, %147, %c0_49] : memref<2x8x32xf32, #tpu.memory_space<vmem>>, vector<2x1x32xf32>
    tpu.vector_store %arg17[%c0_48, %147, %c0_49], %145 {strides = array<i32>} : memref<2x8x32xf32, #tpu.memory_space<vmem>>, vector<2x1x32xf32>,
    %149 = vector.extract_strided_slice %55 {offsets = [0, 3, 0], sizes = [2, 1, 32], strides = [1, 1, 1]} : vector<2x8x32xf32> to vector<2x1x32xf32>
    %150 = vector.shape_cast %149 : vector<2x1x32xf32> to vector<2x32xf32>
    %151 = vector.shape_cast %150 : vector<2x32xf32> to vector<2x1x32xf32>
    %152 = vector.broadcast %151 : vector<2x1x32xf32> to vector<2x8x32xf32>
    %153 = vector.broadcast %50 : vector<1x8x32xf32> to vector<2x8x32xf32>
    %154 = arith.mulf %152, %153 : vector<2x8x32xf32>
    %155 = math.exp %154 : vector<2x8x32xf32>
    %156 = vector.extract_strided_slice %59 {offsets = [0, 3, 0], sizes = [2, 1, 8], strides = [1, 1, 1]} : vector<2x8x8xf32> to vector<2x1x8xf32>
    %157 = vector.shape_cast %156 : vector<2x1x8xf32> to vector<2x8xf32>
    %158 = vector.shape_cast %157 : vector<2x8xf32> to vector<2x8x1xf32>
    %159 = vector.extract_strided_slice %57 {offsets = [0, 3, 0], sizes = [2, 1, 32], strides = [1, 1, 1]} : vector<2x8x32xf32> to vector<2x1x32xf32>
    %160 = vector.shape_cast %159 : vector<2x1x32xf32> to vector<2x32xf32>
    %161 = arith.mulf %150, %160 : vector<2x32xf32>
    %162 = vector.shape_cast %161 : vector<2x32xf32> to vector<2x1x32xf32>
    %163 = vector.broadcast %158 : vector<2x8x1xf32> to vector<2x8x32xf32>
    %164 = vector.broadcast %162 : vector<2x1x32xf32> to vector<2x8x32xf32>
    %165 = arith.mulf %163, %164 : vector<2x8x32xf32>
    %166 = arith.mulf %155, %138 : vector<2x8x32xf32>
    %167 = arith.addf %166, %165 : vector<2x8x32xf32>
    %168 = vector.extract_strided_slice %61 {offsets = [0, 3, 0], sizes = [2, 1, 8], strides = [1, 1, 1]} : vector<2x8x8xf32> to vector<2x1x8xf32>
    %169 = vector.shape_cast %168 : vector<2x1x8xf32> to vector<2x8xf32>
    %170 = vector.shape_cast %169 : vector<2x8xf32> to vector<2x8x1xf32>
    %171 = vector.broadcast %170 : vector<2x8x1xf32> to vector<2x8x32xf32>
    %172 = arith.mulf %167, %171 : vector<2x8x32xf32>
    %cst_50 = arith.constant dense<0.000000e+00> : vector<2x32xf32>
    %173 = vector.multi_reduction <add>, %172, %cst_50 [1] : vector<2x8x32xf32> to vector<2x32xf32>
    %174 = vector.shape_cast %173 : vector<2x32xf32> to vector<2x1x32xf32>
    %c3_i32 = arith.constant 3 : i32
    %175 = arith.addi %53, %c3_i32 : i32
    %c0_51 = arith.constant 0 : index
    %176 = arith.index_cast %175 : i32 to index
    %c0_52 = arith.constant 0 : index
    %177 = vector.load %arg17[%c0_51, %176, %c0_52] : memref<2x8x32xf32, #tpu.memory_space<vmem>>, vector<2x1x32xf32>
    tpu.vector_store %arg17[%c0_51, %176, %c0_52], %174 {strides = array<i32>} : memref<2x8x32xf32, #tpu.memory_space<vmem>>, vector<2x1x32xf32>,
    %178 = vector.extract_strided_slice %55 {offsets = [0, 4, 0], sizes = [2, 1, 32], strides = [1, 1, 1]} : vector<2x8x32xf32> to vector<2x1x32xf32>
    %179 = vector.shape_cast %178 : vector<2x1x32xf32> to vector<2x32xf32>
    %180 = vector.shape_cast %179 : vector<2x32xf32> to vector<2x1x32xf32>
    %181 = vector.broadcast %180 : vector<2x1x32xf32> to vector<2x8x32xf32>
    %182 = vector.broadcast %50 : vector<1x8x32xf32> to vector<2x8x32xf32>
    %183 = arith.mulf %181, %182 : vector<2x8x32xf32>
    %184 = math.exp %183 : vector<2x8x32xf32>
    %185 = vector.extract_strided_slice %59 {offsets = [0, 4, 0], sizes = [2, 1, 8], strides = [1, 1, 1]} : vector<2x8x8xf32> to vector<2x1x8xf32>
    %186 = vector.shape_cast %185 : vector<2x1x8xf32> to vector<2x8xf32>
    %187 = vector.shape_cast %186 : vector<2x8xf32> to vector<2x8x1xf32>
    %188 = vector.extract_strided_slice %57 {offsets = [0, 4, 0], sizes = [2, 1, 32], strides = [1, 1, 1]} : vector<2x8x32xf32> to vector<2x1x32xf32>
    %189 = vector.shape_cast %188 : vector<2x1x32xf32> to vector<2x32xf32>
    %190 = arith.mulf %179, %189 : vector<2x32xf32>
    %191 = vector.shape_cast %190 : vector<2x32xf32> to vector<2x1x32xf32>
    %192 = vector.broadcast %187 : vector<2x8x1xf32> to vector<2x8x32xf32>
    %193 = vector.broadcast %191 : vector<2x1x32xf32> to vector<2x8x32xf32>
    %194 = arith.mulf %192, %193 : vector<2x8x32xf32>
    %195 = arith.mulf %184, %167 : vector<2x8x32xf32>
    %196 = arith.addf %195, %194 : vector<2x8x32xf32>
    %197 = vector.extract_strided_slice %61 {offsets = [0, 4, 0], sizes = [2, 1, 8], strides = [1, 1, 1]} : vector<2x8x8xf32> to vector<2x1x8xf32>
    %198 = vector.shape_cast %197 : vector<2x1x8xf32> to vector<2x8xf32>
    %199 = vector.shape_cast %198 : vector<2x8xf32> to vector<2x8x1xf32>
    %200 = vector.broadcast %199 : vector<2x8x1xf32> to vector<2x8x32xf32>
    %201 = arith.mulf %196, %200 : vector<2x8x32xf32>
    %cst_53 = arith.constant dense<0.000000e+00> : vector<2x32xf32>
    %202 = vector.multi_reduction <add>, %201, %cst_53 [1] : vector<2x8x32xf32> to vector<2x32xf32>
    %203 = vector.shape_cast %202 : vector<2x32xf32> to vector<2x1x32xf32>
    %c4_i32 = arith.constant 4 : i32
    %204 = arith.addi %53, %c4_i32 : i32
    %c0_54 = arith.constant 0 : index
    %205 = arith.index_cast %204 : i32 to index
    %c0_55 = arith.constant 0 : index
    %206 = vector.load %arg17[%c0_54, %205, %c0_55] : memref<2x8x32xf32, #tpu.memory_space<vmem>>, vector<2x1x32xf32>
    tpu.vector_store %arg17[%c0_54, %205, %c0_55], %203 {strides = array<i32>} : memref<2x8x32xf32, #tpu.memory_space<vmem>>, vector<2x1x32xf32>,
    %207 = vector.extract_strided_slice %55 {offsets = [0, 5, 0], sizes = [2, 1, 32], strides = [1, 1, 1]} : vector<2x8x32xf32> to vector<2x1x32xf32>
    %208 = vector.shape_cast %207 : vector<2x1x32xf32> to vector<2x32xf32>
    %209 = vector.shape_cast %208 : vector<2x32xf32> to vector<2x1x32xf32>
    %210 = vector.broadcast %209 : vector<2x1x32xf32> to vector<2x8x32xf32>
    %211 = vector.broadcast %50 : vector<1x8x32xf32> to vector<2x8x32xf32>
    %212 = arith.mulf %210, %211 : vector<2x8x32xf32>
    %213 = math.exp %212 : vector<2x8x32xf32>
    %214 = vector.extract_strided_slice %59 {offsets = [0, 5, 0], sizes = [2, 1, 8], strides = [1, 1, 1]} : vector<2x8x8xf32> to vector<2x1x8xf32>
    %215 = vector.shape_cast %214 : vector<2x1x8xf32> to vector<2x8xf32>
    %216 = vector.shape_cast %215 : vector<2x8xf32> to vector<2x8x1xf32>
    %217 = vector.extract_strided_slice %57 {offsets = [0, 5, 0], sizes = [2, 1, 32], strides = [1, 1, 1]} : vector<2x8x32xf32> to vector<2x1x32xf32>
    %218 = vector.shape_cast %217 : vector<2x1x32xf32> to vector<2x32xf32>
    %219 = arith.mulf %208, %218 : vector<2x32xf32>
    %220 = vector.shape_cast %219 : vector<2x32xf32> to vector<2x1x32xf32>
    %221 = vector.broadcast %216 : vector<2x8x1xf32> to vector<2x8x32xf32>
    %222 = vector.broadcast %220 : vector<2x1x32xf32> to vector<2x8x32xf32>
    %223 = arith.mulf %221, %222 : vector<2x8x32xf32>
    %224 = arith.mulf %213, %196 : vector<2x8x32xf32>
    %225 = arith.addf %224, %223 : vector<2x8x32xf32>
    %226 = vector.extract_strided_slice %61 {offsets = [0, 5, 0], sizes = [2, 1, 8], strides = [1, 1, 1]} : vector<2x8x8xf32> to vector<2x1x8xf32>
    %227 = vector.shape_cast %226 : vector<2x1x8xf32> to vector<2x8xf32>
    %228 = vector.shape_cast %227 : vector<2x8xf32> to vector<2x8x1xf32>
    %229 = vector.broadcast %228 : vector<2x8x1xf32> to vector<2x8x32xf32>
    %230 = arith.mulf %225, %229 : vector<2x8x32xf32>
    %cst_56 = arith.constant dense<0.000000e+00> : vector<2x32xf32>
    %231 = vector.multi_reduction <add>, %230, %cst_56 [1] : vector<2x8x32xf32> to vector<2x32xf32>
    %232 = vector.shape_cast %231 : vector<2x32xf32> to vector<2x1x32xf32>
    %c5_i32 = arith.constant 5 : i32
    %233 = arith.addi %53, %c5_i32 : i32
    %c0_57 = arith.constant 0 : index
    %234 = arith.index_cast %233 : i32 to index
    %c0_58 = arith.constant 0 : index
    %235 = vector.load %arg17[%c0_57, %234, %c0_58] : memref<2x8x32xf32, #tpu.memory_space<vmem>>, vector<2x1x32xf32>
    tpu.vector_store %arg17[%c0_57, %234, %c0_58], %232 {strides = array<i32>} : memref<2x8x32xf32, #tpu.memory_space<vmem>>, vector<2x1x32xf32>,
    %236 = vector.extract_strided_slice %55 {offsets = [0, 6, 0], sizes = [2, 1, 32], strides = [1, 1, 1]} : vector<2x8x32xf32> to vector<2x1x32xf32>
    %237 = vector.shape_cast %236 : vector<2x1x32xf32> to vector<2x32xf32>
    %238 = vector.shape_cast %237 : vector<2x32xf32> to vector<2x1x32xf32>
    %239 = vector.broadcast %238 : vector<2x1x32xf32> to vector<2x8x32xf32>
    %240 = vector.broadcast %50 : vector<1x8x32xf32> to vector<2x8x32xf32>
    %241 = arith.mulf %239, %240 : vector<2x8x32xf32>
    %242 = math.exp %241 : vector<2x8x32xf32>
    %243 = vector.extract_strided_slice %59 {offsets = [0, 6, 0], sizes = [2, 1, 8], strides = [1, 1, 1]} : vector<2x8x8xf32> to vector<2x1x8xf32>
    %244 = vector.shape_cast %243 : vector<2x1x8xf32> to vector<2x8xf32>
    %245 = vector.shape_cast %244 : vector<2x8xf32> to vector<2x8x1xf32>
    %246 = vector.extract_strided_slice %57 {offsets = [0, 6, 0], sizes = [2, 1, 32], strides = [1, 1, 1]} : vector<2x8x32xf32> to vector<2x1x32xf32>
    %247 = vector.shape_cast %246 : vector<2x1x32xf32> to vector<2x32xf32>
    %248 = arith.mulf %237, %247 : vector<2x32xf32>
    %249 = vector.shape_cast %248 : vector<2x32xf32> to vector<2x1x32xf32>
    %250 = vector.broadcast %245 : vector<2x8x1xf32> to vector<2x8x32xf32>
    %251 = vector.broadcast %249 : vector<2x1x32xf32> to vector<2x8x32xf32>
    %252 = arith.mulf %250, %251 : vector<2x8x32xf32>
    %253 = arith.mulf %242, %225 : vector<2x8x32xf32>
    %254 = arith.addf %253, %252 : vector<2x8x32xf32>
    %255 = vector.extract_strided_slice %61 {offsets = [0, 6, 0], sizes = [2, 1, 8], strides = [1, 1, 1]} : vector<2x8x8xf32> to vector<2x1x8xf32>
    %256 = vector.shape_cast %255 : vector<2x1x8xf32> to vector<2x8xf32>
    %257 = vector.shape_cast %256 : vector<2x8xf32> to vector<2x8x1xf32>
    %258 = vector.broadcast %257 : vector<2x8x1xf32> to vector<2x8x32xf32>
    %259 = arith.mulf %254, %258 : vector<2x8x32xf32>
    %cst_59 = arith.constant dense<0.000000e+00> : vector<2x32xf32>
    %260 = vector.multi_reduction <add>, %259, %cst_59 [1] : vector<2x8x32xf32> to vector<2x32xf32>
    %261 = vector.shape_cast %260 : vector<2x32xf32> to vector<2x1x32xf32>
    %c6_i32 = arith.constant 6 : i32
    %262 = arith.addi %53, %c6_i32 : i32
    %c0_60 = arith.constant 0 : index
    %263 = arith.index_cast %262 : i32 to index
    %c0_61 = arith.constant 0 : index
    %264 = vector.load %arg17[%c0_60, %263, %c0_61] : memref<2x8x32xf32, #tpu.memory_space<vmem>>, vector<2x1x32xf32>
    tpu.vector_store %arg17[%c0_60, %263, %c0_61], %261 {strides = array<i32>} : memref<2x8x32xf32, #tpu.memory_space<vmem>>, vector<2x1x32xf32>,
    %265 = vector.extract_strided_slice %55 {offsets = [0, 7, 0], sizes = [2, 1, 32], strides = [1, 1, 1]} : vector<2x8x32xf32> to vector<2x1x32xf32>
    %266 = vector.shape_cast %265 : vector<2x1x32xf32> to vector<2x32xf32>
    %267 = vector.shape_cast %266 : vector<2x32xf32> to vector<2x1x32xf32>
    %268 = vector.broadcast %267 : vector<2x1x32xf32> to vector<2x8x32xf32>
    %269 = vector.broadcast %50 : vector<1x8x32xf32> to vector<2x8x32xf32>
    %270 = arith.mulf %268, %269 : vector<2x8x32xf32>
    %271 = math.exp %270 : vector<2x8x32xf32>
    %272 = vector.extract_strided_slice %59 {offsets = [0, 7, 0], sizes = [2, 1, 8], strides = [1, 1, 1]} : vector<2x8x8xf32> to vector<2x1x8xf32>
    %273 = vector.shape_cast %272 : vector<2x1x8xf32> to vector<2x8xf32>
    %274 = vector.shape_cast %273 : vector<2x8xf32> to vector<2x8x1xf32>
    %275 = vector.extract_strided_slice %57 {offsets = [0, 7, 0], sizes = [2, 1, 32], strides = [1, 1, 1]} : vector<2x8x32xf32> to vector<2x1x32xf32>
    %276 = vector.shape_cast %275 : vector<2x1x32xf32> to vector<2x32xf32>
    %277 = arith.mulf %266, %276 : vector<2x32xf32>
    %278 = vector.shape_cast %277 : vector<2x32xf32> to vector<2x1x32xf32>
    %279 = vector.broadcast %274 : vector<2x8x1xf32> to vector<2x8x32xf32>
    %280 = vector.broadcast %278 : vector<2x1x32xf32> to vector<2x8x32xf32>
    %281 = arith.mulf %279, %280 : vector<2x8x32xf32>
    %282 = arith.mulf %271, %254 : vector<2x8x32xf32>
    %283 = arith.addf %282, %281 : vector<2x8x32xf32>
    %284 = vector.extract_strided_slice %61 {offsets = [0, 7, 0], sizes = [2, 1, 8], strides = [1, 1, 1]} : vector<2x8x8xf32> to vector<2x1x8xf32>
    %285 = vector.shape_cast %284 : vector<2x1x8xf32> to vector<2x8xf32>
    %286 = vector.shape_cast %285 : vector<2x8xf32> to vector<2x8x1xf32>
    %287 = vector.broadcast %286 : vector<2x8x1xf32> to vector<2x8x32xf32>
    %288 = arith.mulf %283, %287 : vector<2x8x32xf32>
    %cst_62 = arith.constant dense<0.000000e+00> : vector<2x32xf32>
    %289 = vector.multi_reduction <add>, %288, %cst_62 [1] : vector<2x8x32xf32> to vector<2x32xf32>
    %290 = vector.shape_cast %289 : vector<2x32xf32> to vector<2x1x32xf32>
    %c7_i32 = arith.constant 7 : i32
    %291 = arith.addi %53, %c7_i32 : i32
    %c0_63 = arith.constant 0 : index
    %292 = arith.index_cast %291 : i32 to index
    %c0_64 = arith.constant 0 : index
    %293 = vector.load %arg17[%c0_63, %292, %c0_64] : memref<2x8x32xf32, #tpu.memory_space<vmem>>, vector<2x1x32xf32>
    tpu.vector_store %arg17[%c0_63, %292, %c0_64], %290 {strides = array<i32>} : memref<2x8x32xf32, #tpu.memory_space<vmem>>, vector<2x1x32xf32>,
    %c1_i32_65 = arith.constant 1 : i32
    %c0_66 = arith.constant 0 : index
    %c0_67 = arith.constant 0 : index
    %c0_68 = arith.constant 0 : index
    %294 = vector.load %arg17[%c0_66, %c0_67, %c0_68] : memref<2x8x32xf32, #tpu.memory_space<vmem>>, vector<2x8x32xf32>
    %c0_69 = arith.constant 0 : index
    %c0_70 = arith.constant 0 : index
    %295 = vector.load %arg7[%c0_69, %c0_70] : memref<1x32xf32, #tpu.memory_space<vmem>>, vector<1x32xf32>
    %c0_71 = arith.constant 0 : index
    %c0_72 = arith.constant 0 : index
    %c0_73 = arith.constant 0 : index
    %296 = vector.load %arg13[%c0_71, %c0_72, %c0_73] : memref<2x8x32xf32, #tpu.memory_space<vmem>>, vector<2x8x32xf32>
    %297 = vector.shape_cast %295 : vector<1x32xf32> to vector<1x1x32xf32>
    %298 = vector.broadcast %297 : vector<1x1x32xf32> to vector<2x8x32xf32>
    %299 = arith.mulf %298, %296 : vector<2x8x32xf32>
    %300 = arith.addf %294, %299 : vector<2x8x32xf32>
    %cst_74 = arith.constant 5.000000e-01 : f32
    %301 = vector.broadcast %cst_74 : f32 to vector<2x8x32xf32>
    %302 = arith.mulf %301, %300 : vector<2x8x32xf32>
    %cst_75 = arith.constant 0.707106769 : f32
    %303 = vector.broadcast %cst_75 : f32 to vector<2x8x32xf32>
    %304 = arith.mulf %300, %303 : vector<2x8x32xf32>
    %305 = math.erf %304 : vector<2x8x32xf32>
    %cst_76 = arith.constant 1.000000e+00 : f32
    %306 = vector.broadcast %cst_76 : f32 to vector<2x8x32xf32>
    %307 = arith.addf %306, %305 : vector<2x8x32xf32>
    %308 = arith.mulf %302, %307 : vector<2x8x32xf32>
    %309 = vector.shape_cast %308 : vector<2x8x32xf32> to vector<16x32xf32>
    %c0_77 = arith.constant 0 : index
    %c0_78 = arith.constant 0 : index
    %310 = vector.load %arg8[%c0_77, %c0_78] : memref<32x32xf32, #tpu.memory_space<vmem>>, vector<32x32xf32>
    %cst_79 = arith.constant dense<0.000000e+00> : vector<16x32xf32>
    %311 = tpu.matmul %309, %310, %cst_79 {dimension_numbers = #tpu.dot_dimension_numbers<[1], [0], [0], [1], [0, 0, 1, 1], [], []>} : vector<16x32xf32>, vector<32x32xf32>, vector<16x32xf32> -> vector<16x32xf32>
    %c0_80 = arith.constant 0 : index
    %c0_81 = arith.constant 0 : index
    %312 = vector.load %arg9[%c0_80, %c0_81] : memref<1x32xf32, #tpu.memory_space<vmem>>, vector<1x32xf32>
    %313 = vector.broadcast %312 : vector<1x32xf32> to vector<16x32xf32>
    %314 = arith.addf %311, %313 : vector<16x32xf32>
    %c0_82 = arith.constant 0 : index
    %c0_83 = arith.constant 0 : index
    %315 = vector.load %arg10[%c0_82, %c0_83] : memref<32x32xf32, #tpu.memory_space<vmem>>, vector<32x32xf32>
    %cst_84 = arith.constant dense<0.000000e+00> : vector<16x32xf32>
    %316 = tpu.matmul %309, %315, %cst_84 {dimension_numbers = #tpu.dot_dimension_numbers<[1], [0], [0], [1], [0, 0, 1, 1], [], []>} : vector<16x32xf32>, vector<32x32xf32>, vector<16x32xf32> -> vector<16x32xf32>
    %c0_85 = arith.constant 0 : index
    %c0_86 = arith.constant 0 : index
    %317 = vector.load %arg11[%c0_85, %c0_86] : memref<1x32xf32, #tpu.memory_space<vmem>>, vector<1x32xf32>
    %318 = vector.broadcast %317 : vector<1x32xf32> to vector<16x32xf32>
    %319 = arith.addf %316, %318 : vector<16x32xf32>
    %320 = arith.negf %319 : vector<16x32xf32>
    %321 = math.exp %320 : vector<16x32xf32>
    %cst_87 = arith.constant 1.000000e+00 : f32
    %322 = vector.broadcast %cst_87 : f32 to vector<16x32xf32>
    %323 = arith.addf %322, %321 : vector<16x32xf32>
    %324 = arith.divf %322, %323 : vector<16x32xf32>
    %325 = arith.mulf %314, %324 : vector<16x32xf32>
    %326 = vector.shape_cast %325 : vector<16x32xf32> to vector<2x8x32xf32>
    %c0_88 = arith.constant 0 : index
    %c0_89 = arith.constant 0 : index
    %c0_90 = arith.constant 0 : index
    %327 = vector.load %arg1[%c0_88, %c0_89, %c0_90] : memref<2x8x32xf32, #tpu.memory_space<vmem>>, vector<2x8x32xf32>
    %328 = arith.addf %326, %327 : vector<2x8x32xf32>
    %c0_91 = arith.constant 0 : index
    %c0_92 = arith.constant 0 : index
    %c0_93 = arith.constant 0 : index
    %329 = vector.load %arg12[%c0_91, %c0_92, %c0_93] : memref<2x8x32xf32, #tpu.memory_space<vmem>>, vector<2x8x32xf32>
    tpu.vector_store %arg12[%c0_91, %c0_92, %c0_93], %328 {strides = array<i32>} : memref<2x8x32xf32, #tpu.memory_space<vmem>>, vector<2x8x32xf32>,
    return
  }
  func.func @transform_0(%arg0: i32) -> (i32, i32, i32) {
    %c0_i32 = arith.constant 0 : i32
    %c0_i32_0 = arith.constant 0 : i32
    %c0_i32_1 = arith.constant 0 : i32
    return %arg0, %c0_i32, %c0_i32_0 : i32, i32, i32
  }
  func.func @transform_1(%arg0: i32) -> (i32, i32) {
    %c0_i32 = arith.constant 0 : i32
    %c0_i32_0 = arith.constant 0 : i32
    %c0_i32_1 = arith.constant 0 : i32
    return %c0_i32, %c0_i32_0 : i32, i32
  }
  func.func @transform_2(%arg0: i32) -> (i32, i32) {
    %c0_i32 = arith.constant 0 : i32
    %c0_i32_0 = arith.constant 0 : i32
    %c0_i32_1 = arith.constant 0 : i32
    return %c0_i32, %c0_i32_0 : i32, i32
  }
  func.func @transform_3(%arg0: i32) -> (i32, i32) {
    %c0_i32 = arith.constant 0 : i32
    %c0_i32_0 = arith.constant 0 : i32
    %c0_i32_1 = arith.constant 0 : i32
    return %c0_i32, %c0_i32_0 : i32, i32
  }
  func.func @transform_4(%arg0: i32) -> (i32, i32) {
    %c0_i32 = arith.constant 0 : i32
    %c0_i32_0 = arith.constant 0 : i32
    %c0_i32_1 = arith.constant 0 : i32
    return %c0_i32, %c0_i32_0 : i32, i32
  }
  func.func @transform_5(%arg0: i32) -> (i32, i32) {
    %c0_i32 = arith.constant 0 : i32
    %c0_i32_0 = arith.constant 0 : i32
    %c0_i32_1 = arith.constant 0 : i32
    return %c0_i32, %c0_i32_0 : i32, i32
  }
  func.func @transform_6(%arg0: i32) -> (i32, i32) {
    %c0_i32 = arith.constant 0 : i32
    %c0_i32_0 = arith.constant 0 : i32
    %c0_i32_1 = arith.constant 0 : i32
    return %c0_i32, %c0_i32_0 : i32, i32
  }
  func.func @transform_7(%arg0: i32) -> (i32, i32) {
    %c0_i32 = arith.constant 0 : i32
    %c0_i32_0 = arith.constant 0 : i32
    %c0_i32_1 = arith.constant 0 : i32
    return %c0_i32, %c0_i32_0 : i32, i32
  }
  func.func @transform_8(%arg0: i32) -> (i32, i32) {
    %c0_i32 = arith.constant 0 : i32
    %c0_i32_0 = arith.constant 0 : i32
    %c0_i32_1 = arith.constant 0 : i32
    return %c0_i32, %c0_i32_0 : i32, i32
  }
  func.func @transform_9(%arg0: i32) -> (i32, i32) {
    %c0_i32 = arith.constant 0 : i32
    %c0_i32_0 = arith.constant 0 : i32
    %c0_i32_1 = arith.constant 0 : i32
    return %c0_i32, %c0_i32_0 : i32, i32
  }
  func.func @transform_10(%arg0: i32) -> (i32, i32) {
    %c0_i32 = arith.constant 0 : i32
    %c0_i32_0 = arith.constant 0 : i32
    %c0_i32_1 = arith.constant 0 : i32
    return %c0_i32, %c0_i32_0 : i32, i32
  }
  func.func @transform_11(%arg0: i32) -> (i32, i32, i32) {
    %c0_i32 = arith.constant 0 : i32
    %c0_i32_0 = arith.constant 0 : i32
    %c0_i32_1 = arith.constant 0 : i32
    return %arg0, %c0_i32, %c0_i32_0 : i32, i32, i32
  }
}

</mosaic_0001>

<llo_original>
// kernel: tpu_custom_call.1
$region0: #{tpu_custom_call.1}
  #allocation0 [shape = 'u32[]', space=smem, size = 0x4, offset = 0x4, fixed_abs, tag = 'smem constant byte address 0x4 - core index']
  #allocation1 [shape = 'u32[144,128]{1,0:T(1,128)}', space=vmem, size = 0x12000, scoped, tag = 'internal scratch']
  #allocation2 [shape = 'f32[2,8,32]{2,1,0:T(8,128)}', space=vmem, size = 0x2000, scoped, tag = 'scratch operand']
  #allocation3 [shape = 'f32[2,8,32]{2,1,0:T(8,128)}', space=vmem, size = 0x2000, scoped, tag = 'scratch operand']
  #allocation4 [shape = 'f32[2,8,8]{2,1,0:T(8,128)}', space=vmem, size = 0x2000, scoped, tag = 'scratch operand']
  #allocation5 [shape = 'f32[2,8,8]{2,1,0:T(8,128)}', space=vmem, size = 0x2000, scoped, tag = 'scratch operand']
  #allocation6 [shape = 'f32[2,8,32]{2,1,0:T(8,128)}', space=vmem, size = 0x2000, scoped, tag = 'scratch operand']
  %s0 = inlined_call_operand.hbm [shape: f32[2,8,32], index: 0, kind: input, shape index: {}]
  %s1 = inlined_call_operand.vmem [shape: f32[1,32], index: 1, kind: input, shape index: {}]
  %s2 = inlined_call_operand.vmem [shape: f32[1,32], index: 2, kind: input, shape index: {}]
  %s3 = inlined_call_operand.hbm [shape: f32[32,48], index: 3, kind: input, shape index: {}]
  %s4 = inlined_call_operand.hbm [shape: f32[1,32], index: 4, kind: input, shape index: {}]
  %s5 = inlined_call_operand.hbm [shape: f32[8,32], index: 5, kind: input, shape index: {}]
  %s6 = inlined_call_operand.hbm [shape: f32[1,32], index: 6, kind: input, shape index: {}]
  %s7 = inlined_call_operand.hbm [shape: f32[32,32], index: 7, kind: input, shape index: {}]
  %s8 = inlined_call_operand.hbm [shape: f32[1,32], index: 8, kind: input, shape index: {}]
  %s9 = inlined_call_operand.vmem [shape: f32[32,32], index: 9, kind: input, shape index: {}]
  %s10 = inlined_call_operand.vmem [shape: f32[1,32], index: 10, kind: input, shape index: {}]
  %s11 = inlined_call_operand.hbm [shape: f32[2,8,32], index: 11, kind: output, shape index: {}]
  %s12 = sld [smem:[#allocation0]]
  $region82: #{tpu_custom_call.1} parent=0
    _
  %s14 = ssub.s32 1, %s12
  %s15 = scalar_select 0, %s14, %s12
  $region1: #{tpu_custom_call.1} parent=0
    #allocation7 [shape = 'u8[8192]{0}', space=vmem, size = 0x2000, scoped, tag = 'input window, operand 0, single buffered']
    #allocation8 [shape = 's32[1]{0}', space=sflag, size = 0x4, scoped, tag = 'scoped memory for tpu_custom_call.1']
    #allocation9 [shape = 's32[1]{0}', space=sflag, size = 0x4, scoped, tag = 'scoped memory for tpu_custom_call.1']
    #allocation10 [shape = 'u8[16384]{0}', space=vmem, size = 0x4000, scoped, tag = 'input window, operand 3, single buffered']
    #allocation11 [shape = 's32[1]{0}', space=sflag, size = 0x4, scoped, tag = 'scoped memory for tpu_custom_call.1']
    #allocation12 [shape = 'u8[512]{0}', space=vmem, size = 0x400, scoped, tag = 'input window, operand 4, single buffered']
    #allocation13 [shape = 'u8[4096]{0}', space=vmem, size = 0x1000, scoped, tag = 'input window, operand 5, single buffered']
    #allocation14 [shape = 's32[1]{0}', space=sflag, size = 0x4, scoped, tag = 'scoped memory for tpu_custom_call.1']
    #allocation15 [shape = 'u8[512]{0}', space=vmem, size = 0x400, scoped, tag = 'input window, operand 6, single buffered']
    #allocation16 [shape = 'u8[16384]{0}', space=vmem, size = 0x4000, scoped, tag = 'input window, operand 7, single buffered']
    #allocation17 [shape = 's32[1]{0}', space=sflag, size = 0x4, scoped, tag = 'scoped memory for tpu_custom_call.1']
    #allocation18 [shape = 'u8[512]{0}', space=vmem, size = 0x400, scoped, tag = 'input window, operand 8, single buffered']
    #allocation19 [shape = 'u8[8192]{0}', space=vmem, size = 0x2000, scoped, tag = 'output window, operand 0, single buffered']
    %16 = vsyncpa [#allocation8], 0
    %17 = vsyncpa [#allocation11], 0
    %18 = vsyncpa [#allocation14], 0
    %19 = vsyncpa [#allocation17], 0
    %20 = vsyncpa [#allocation9], 0
    // Predicated region
    $region2: #{tpu_custom_call.1} parent=1 // pred_check
      _
    $region3: #{tpu_custom_call.1} parent=1 // pred_check_branch
      %22 = sbr.rel (0) target = $region5
    $region4: #{tpu_custom_call.1} parent=1 // pred_region
      %s24 = ssub.s32 256, 256
      %25 = vsyncadd [#allocation8], %s24
      %s26 = sshll.u32 [#allocation7], 4
      %s27 = int_to_ptr.vmem [resolvable:$true] %s26
      %32 = dma.hbm_to_vmem [thread:$0]  %s0, 256, %s27, [#allocation8], 128, 128, 8
    $region5: #{tpu_custom_call.1} parent=1 // pred_fallthru
      _
    // Predicated region
    $region6: #{tpu_custom_call.1} parent=1 // pred_check
      _
    $region7: #{tpu_custom_call.1} parent=1 // pred_check_branch
      %34 = sbr.rel (0) target = $region9
    $region8: #{tpu_custom_call.1} parent=1 // pred_region
      _
    $region9: #{tpu_custom_call.1} parent=1 // pred_fallthru
      _
    // Predicated region
    $region10: #{tpu_custom_call.1} parent=1 // pred_check
      _
    $region11: #{tpu_custom_call.1} parent=1 // pred_check_branch
      %36 = sbr.rel (0) target = $region13
    $region12: #{tpu_custom_call.1} parent=1 // pred_region
      _
    $region13: #{tpu_custom_call.1} parent=1 // pred_fallthru
      _
    // Predicated region
    $region14: #{tpu_custom_call.1} parent=1 // pred_check
      _
    $region15: #{tpu_custom_call.1} parent=1 // pred_check_branch
      %38 = sbr.rel (0) target = $region17
    $region16: #{tpu_custom_call.1} parent=1 // pred_region
      %s40 = ssub.s32 512, 512
      %41 = vsyncadd [#allocation11], %s40
      %s42 = sshll.u32 [#allocation10], 4
      %s43 = int_to_ptr.vmem [resolvable:$true] %s42
      %48 = dma.hbm_to_vmem [thread:$0]  %s3, 512, %s43, [#allocation11], 128, 128, 8
    $region17: #{tpu_custom_call.1} parent=1 // pred_fallthru
      _
    // Predicated region
    $region18: #{tpu_custom_call.1} parent=1 // pred_check
      _
    $region19: #{tpu_custom_call.1} parent=1 // pred_check_branch
      %50 = sbr.rel (0) target = $region21
    $region20: #{tpu_custom_call.1} parent=1 // pred_region
      %s52 = ssub.s32 16, 16
      %53 = vsyncadd [#allocation11], %s52
      %s55 = sshll.u32 [#allocation12], 4
      %s56 = int_to_ptr.vmem [resolvable:$true] %s55
      %58 = dma.hbm_to_vmem [thread:$0]  %s4, 16, %s56, [#allocation11]
    $region21: #{tpu_custom_call.1} parent=1 // pred_fallthru
      _
    // Predicated region
    $region22: #{tpu_custom_call.1} parent=1 // pred_check
      _
    $region23: #{tpu_custom_call.1} parent=1 // pred_check_branch
      %60 = sbr.rel (0) target = $region25
    $region24: #{tpu_custom_call.1} parent=1 // pred_region
      %s62 = ssub.s32 128, 128
      %63 = vsyncadd [#allocation14], %s62
      %s65 = sshll.u32 [#allocation13], 4
      %s66 = int_to_ptr.vmem [resolvable:$true] %s65
      %68 = dma.hbm_to_vmem [thread:$0]  %s5, 128, %s66, [#allocation14]
    $region25: #{tpu_custom_call.1} parent=1 // pred_fallthru
      _
    // Predicated region
    $region26: #{tpu_custom_call.1} parent=1 // pred_check
      _
    $region27: #{tpu_custom_call.1} parent=1 // pred_check_branch
      %70 = sbr.rel (0) target = $region29
    $region28: #{tpu_custom_call.1} parent=1 // pred_region
      %s72 = ssub.s32 16, 16
      %73 = vsyncadd [#allocation14], %s72
      %s75 = sshll.u32 [#allocation15], 4
      %s76 = int_to_ptr.vmem [resolvable:$true] %s75
      %78 = dma.hbm_to_vmem [thread:$0]  %s6, 16, %s76, [#allocation14]
    $region29: #{tpu_custom_call.1} parent=1 // pred_fallthru
      _
    // Predicated region
    $region30: #{tpu_custom_call.1} parent=1 // pred_check
      _
    $region31: #{tpu_custom_call.1} parent=1 // pred_check_branch
      %80 = sbr.rel (0) target = $region33
    $region32: #{tpu_custom_call.1} parent=1 // pred_region
      %s82 = ssub.s32 512, 512
      %83 = vsyncadd [#allocation17], %s82
      %s84 = sshll.u32 [#allocation16], 4
      %s85 = int_to_ptr.vmem [resolvable:$true] %s84
      %90 = dma.hbm_to_vmem [thread:$0]  %s7, 512, %s85, [#allocation17], 128, 128, 8
    $region33: #{tpu_custom_call.1} parent=1 // pred_fallthru
      _
    // Predicated region
    $region34: #{tpu_custom_call.1} parent=1 // pred_check
      _
    $region35: #{tpu_custom_call.1} parent=1 // pred_check_branch
      %92 = sbr.rel (0) target = $region37
    $region36: #{tpu_custom_call.1} parent=1 // pred_region
      %s94 = ssub.s32 16, 16
      %95 = vsyncadd [#allocation17], %s94
      %s97 = sshll.u32 [#allocation18], 4
      %s98 = int_to_ptr.vmem [resolvable:$true] %s97
      %100 = dma.hbm_to_vmem [thread:$0]  %s8, 16, %s98, [#allocation17]
    $region37: #{tpu_custom_call.1} parent=1 // pred_fallthru
      _
    // Predicated region
    $region38: #{tpu_custom_call.1} parent=1 // pred_check
      _
    $region39: #{tpu_custom_call.1} parent=1 // pred_check_branch
      %102 = sbr.rel (0) target = $region41
    $region40: #{tpu_custom_call.1} parent=1 // pred_region
      _
    $region41: #{tpu_custom_call.1} parent=1 // pred_fallthru
      _
    // Predicated region
    $region42: #{tpu_custom_call.1} parent=1 // pred_check
      _
    $region43: #{tpu_custom_call.1} parent=1 // pred_check_branch
      %104 = sbr.rel (0) target = $region45
    $region44: #{tpu_custom_call.1} parent=1 // pred_region
      _
    $region45: #{tpu_custom_call.1} parent=1 // pred_fallthru
      _
    // Predicated region
    $region46: #{tpu_custom_call.1} parent=1 // pred_check
      _
    $region47: #{tpu_custom_call.1} parent=1 // pred_check_branch
      %106 = sbr.rel (0) target = $region49
    $region48: #{tpu_custom_call.1} parent=1 // pred_region
      %107 = dma.done [#allocation8], 256
    $region49: #{tpu_custom_call.1} parent=1 // pred_fallthru
      _
    // Predicated region
    $region50: #{tpu_custom_call.1} parent=1 // pred_check
      _
    $region51: #{tpu_custom_call.1} parent=1 // pred_check_branch
      %109 = sbr.rel (0) target = $region53
    $region52: #{tpu_custom_call.1} parent=1 // pred_region
      %110 = dma.done [#allocation11], 512
    $region53: #{tpu_custom_call.1} parent=1 // pred_fallthru
      _
    // Predicated region
    $region54: #{tpu_custom_call.1} parent=1 // pred_check
      _
    $region55: #{tpu_custom_call.1} parent=1 // pred_check_branch
      %112 = sbr.rel (0) target = $region57
    $region56: #{tpu_custom_call.1} parent=1 // pred_region
      %113 = dma.done [#allocation11], 16
    $region57: #{tpu_custom_call.1} parent=1 // pred_fallthru
      _
    // Predicated region
    $region58: #{tpu_custom_call.1} parent=1 // pred_check
      _
    $region59: #{tpu_custom_call.1} parent=1 // pred_check_branch
      %115 = sbr.rel (0) target = $region61
    $region60: #{tpu_custom_call.1} parent=1 // pred_region
      %116 = dma.done [#allocation14], 128
    $region61: #{tpu_custom_call.1} parent=1 // pred_fallthru
      _
    // Predicated region
    $region62: #{tpu_custom_call.1} parent=1 // pred_check
      _
    $region63: #{tpu_custom_call.1} parent=1 // pred_check_branch
      %118 = sbr.rel (0) target = $region65
    $region64: #{tpu_custom_call.1} parent=1 // pred_region
      %119 = dma.done [#allocation14], 16
    $region65: #{tpu_custom_call.1} parent=1 // pred_fallthru
      _
    // Predicated region
    $region66: #{tpu_custom_call.1} parent=1 // pred_check
      _
    $region67: #{tpu_custom_call.1} parent=1 // pred_check_branch
      %121 = sbr.rel (0) target = $region69
    $region68: #{tpu_custom_call.1} parent=1 // pred_region
      %122 = dma.done [#allocation17], 512
    $region69: #{tpu_custom_call.1} parent=1 // pred_fallthru
      _
    // Predicated region
    $region70: #{tpu_custom_call.1} parent=1 // pred_check
      _
    $region71: #{tpu_custom_call.1} parent=1 // pred_check_branch
      %124 = sbr.rel (0) target = $region73
    $region72: #{tpu_custom_call.1} parent=1 // pred_region
      %125 = dma.done [#allocation17], 16
    $region73: #{tpu_custom_call.1} parent=1 // pred_fallthru
      _
    %v126 = vld [vmem:[#allocation7] sm:$0xff]
    %v127 = vld [vmem:[#allocation7 + $0x8] sm:$0xff]
    %vm128 = vcmask 261120
    %v129 = vsel %vm128, %v126, 0.0
    %130 = vadd.xlane.f32.xlu0 %v129
    %v131 = vpop.xlane.xlu0 %130
    %v132 = vsel %vm128, %v127, 0.0
    %133 = vadd.xlane.f32.xlu0 %v132
    %v134 = vpop.xlane.xlu0 %133
    %v135 = vrcp.pop 32.0
    %v136 = vmul.f32 %v131, %v135
    %v137 = vmul.f32 %v134, %v135
    %v138 = vsub.f32 %v126, %v136
    %v139 = vsub.f32 %v127, %v137
    %v140 = vmul.f32 %v138, %v138
    %v141 = vmul.f32 %v139, %v139
    %v142 = vsel %vm128, %v140, 0.0
    %143 = vadd.xlane.f32.xlu0 %v142
    %v144 = vpop.xlane.xlu0 %143
    %v145 = vsel %vm128, %v141, 0.0
    %146 = vadd.xlane.f32.xlu0 %v145
    %v147 = vpop.xlane.xlu0 %146
    %v148 = vmul.f32 %v144, %v135
    %v149 = vmul.f32 %v147, %v135
    %v150 = vadd.f32 %v148, 1e-05
    %v151 = vadd.f32 %v149, 1e-05
    %v152 = vrsqrt.pop %v150
    %v153 = vrsqrt.pop %v151
    %v154 = vmul.f32 %v138, %v152
    %v155 = vmul.f32 %v139, %v153
    %v156 = vld [vmem:[%s1] sm:$0x1]
    %v158 = vlaneseq
    %v159 = vshrl.u32 %v158, 7
    %v160 = vsub.s32 0, %v159
    %v161 = vrot.slane %v156, %v160
    %v163 = vmul.f32 %v154, %v161
    %v164 = vmul.f32 %v155, %v161
    %v165 = vld [vmem:[%s2] sm:$0x1]
    %v167 = vlaneseq
    %v168 = vshrl.u32 %v167, 7
    %v169 = vsub.s32 0, %v168
    %v170 = vrot.slane %v165, %v169
    %v172 = vadd.f32 %v163, %v170
    %v173 = vadd.f32 %v164, %v170
    %174 = vst.msk [vmem:[#allocation2] sm:$0xff] %vm128, %v172
    %175 = vst.msk [vmem:[#allocation2 + $0x8] sm:$0xff] %vm128, %v173
    %v176 = vld [vmem:[#allocation10] sm:$0xff]
    %v177 = vld [vmem:[#allocation10 + $0x8] sm:$0xff]
    %v178 = vld [vmem:[#allocation10 + $0x10] sm:$0xff]
    %v179 = vld [vmem:[#allocation10 + $0x18] sm:$0xff]
    %v181 = vsel %vm128, %v172, 0
    %v184 = vsel %vm128, %v173, 0
    %186 = vmatprep.subr.mxu0 0.0
    %187 = vmatpush1.msra.mxu0 %v176
    %188 = vmatprep.subr.mxu0 0.0
    %189 = vmatpush1.msra.mxu0 %v177
    %190 = vmatprep.subr.mxu0 0.0
    %191 = vmatpush1.msra.mxu0 %v178
    %192 = vmatprep.subr.mxu0 0.0
    %193 = vmatpush1.msra.mxu0 %v179
    %194 = vmatprep.subr.mxu0 0.0
    %195 = vmatpush1.msra.mxu0 0.0
    %196 = vmatprep.subr.mxu0 0.0
    %197 = vmatpush1.msra.mxu0 0.0
    %198 = vmatprep.subr.mxu0 0.0
    %199 = vmatpush1.msra.mxu0 0.0
    %200 = vmatprep.subr.mxu0 0.0
    %201 = vmatpush1.msra.mxu0 0.0
    %202 = vmatprep.subr.mxu0 0.0
    %203 = vmatpush1.msra.mxu0 0.0
    %204 = vmatprep.subr.mxu0 0.0
    %205 = vmatpush1.msra.mxu0 0.0
    %206 = vmatprep.subr.mxu0 0.0
    %207 = vmatpush1.msra.mxu0 0.0
    %208 = vmatprep.subr.mxu0 0.0
    %209 = vmatpush1.msra.mxu0 0.0
    %210 = vmatprep.subr.mxu0 0.0
    %211 = vmatpush1.msra.mxu0 0.0
    %212 = vmatprep.subr.mxu0 0.0
    %213 = vmatpush1.msra.mxu0 0.0
    %214 = vmatprep.subr.mxu0 0.0
    %215 = vmatpush1.msra.mxu0 0.0
    %216 = vmatprep.subr.mxu0 0.0
    %217 = vmatpush1.msra.mxu0 0.0
    %218 = vmatprep.subr.mxu0 0.0
    %219 = vmatpush1.msra.mxu0 0.0
    %220 = vmatprep.subr.mxu0 0.0
    %221 = vmatpush1.msra.mxu0 0.0
    %222 = vmatprep.subr.mxu0 0.0
    %223 = vmatpush1.msra.mxu0 0.0
    %224 = vmatprep.subr.mxu0 0.0
    %225 = vmatpush1.msra.mxu0 0.0
    %226 = vmatprep.subr.mxu0 0.0
    %227 = vmatpush1.msra.mxu0 0.0
    %228 = vmatprep.subr.mxu0 0.0
    %229 = vmatpush1.msra.mxu0 0.0
    %230 = vmatprep.subr.mxu0 0.0
    %231 = vmatpush1.msra.mxu0 0.0
    %232 = vmatprep.subr.mxu0 0.0
    %233 = vmatpush1.msra.mxu0 0.0
    %234 = vmatprep.subr.mxu0 0.0
    %235 = vmatpush1.msra.mxu0 0.0
    %236 = vmatprep.subr.mxu0 0.0
    %237 = vmatpush1.msra.mxu0 0.0
    %238 = vmatprep.subr.mxu0 0.0
    %239 = vmatpush1.msra.mxu0 0.0
    %240 = vmatprep.subr.mxu0 0.0
    %241 = vmatpush1.msra.mxu0 0.0
    %242 = vmatprep.subr.mxu0 0.0
    %243 = vmatpush1.msra.mxu0 0.0
    %244 = vmatprep.subr.mxu0 0.0
    %245 = vmatpush1.msra.mxu0 0.0
    %246 = vmatprep.subr.mxu0 0.0
    %247 = vmatpush1.msra.mxu0 0.0
    %248 = vmatprep.subr.mxu0 0.0
    %249 = vmatpush1.msra.mxu0 0.0
    %250 = vmatprep.mubr.f32.mxu0 0.0
    %251 = vmatmul.mubr.f32.gmra.mrb[0].mxu0 %v181
    %v252 = vpop.f32.mrb[0].mxu0
    %v253 = vadd.f32 0.0, %v252
    %v254 = vpop.f32.mrb[0].mxu0
    %255 = vmatprep.mubr.f32.mxu0 0.0
    %256 = vmatmul.mubr.f32.gmra.mrb[0].mxu0 %v184
    %v257 = vpop.f32.mrb[0].mxu0
    %v258 = vadd.f32 0.0, %v257
    %v259 = vpop.f32.mrb[0].mxu0
    %260 = vdwg.mxu0
    %v261 = vld [vmem:[#allocation12] sm:$0x1]
    %v263 = vlaneseq
    %v264 = vshrl.u32 %v263, 7
    %v265 = vsub.s32 0, %v264
    %v266 = vrot.slane %v261, %v265
    %v268 = vadd.f32 %v253, %v266
    %v269 = vadd.f32 %v258, %v266
    %v270 = vmax.f32 %v268, 0.0
    %v271 = vmax.f32 %v269, 0.0
    %v272 = vand.u32 2147483647, %v268
    %v273 = vand.u32 2147483647, %v269
    %v274 = vsub.f32 0.0, %v272
    %v275 = vsub.f32 0.0, %v273
    %v276 = vmul.f32 %v274, 1.442695
    %v277 = vpow.pop %v276
    %v278 = vmul.f32 %v275, 1.442695
    %v279 = vpow.pop %v278
    %v280 = vadd.f32 %v277, 1.0
    %v281 = vlog2.pop %v280
    %v282 = vmul.f32 %v281, 0.6931472
    %v283 = vmul.f32 -0.5, %v277
    %v284 = vadd.f32 %v283, 1.0
    %v285 = vmul.f32 %v284, %v277
    %v286 = vand.u32 2147483647, %v277
    %vm287 = vcmp.lt.f32.partialorder %v286, 0.0004427343
    %v288 = vsel %vm287, %v285, %v282
    %v289 = vadd.f32 %v279, 1.0
    %v290 = vlog2.pop %v289
    %v291 = vmul.f32 %v290, 0.6931472
    %v292 = vmul.f32 -0.5, %v279
    %v293 = vadd.f32 %v292, 1.0
    %v294 = vmul.f32 %v293, %v279
    %v295 = vand.u32 2147483647, %v279
    %vm296 = vcmp.lt.f32.partialorder %v295, 0.0004427343
    %v297 = vsel %vm296, %v294, %v291
    %v298 = vadd.f32 %v270, %v288
    %v299 = vadd.f32 %v271, %v297
    %300 = vst.msk [vmem:[#allocation3] sm:$0xff] %vm128, %v298
    %301 = vst.msk [vmem:[#allocation3 + $0x8] sm:$0xff] %vm128, %v299
    %304 = vrot.lane.b32.xlu0 %v253, 96
    %v305 = vpop.permute.xlu0 %304
    %306 = vrot.lane.b32.xlu0 %v258, 96
    %v307 = vpop.permute.xlu0 %306
    %vm310 = vcmask 64512
    %311 = vst.msk [vmem:[#allocation4] sm:$0xff] %vm310, %v305
    %312 = vst.msk [vmem:[#allocation4 + $0x8] sm:$0xff] %vm310, %v307
    %313 = vrot.lane.b32.xlu0 %v253, 88
    %v314 = vpop.permute.xlu0 %313
    %315 = vrot.lane.b32.xlu0 %v258, 88
    %v316 = vpop.permute.xlu0 %315
    %319 = vst.msk [vmem:[#allocation5] sm:$0xff] %vm310, %v314
    %320 = vst.msk [vmem:[#allocation5 + $0x8] sm:$0xff] %vm310, %v316
    %v321 = vld [vmem:[#allocation13] sm:$0xff]
    %v322 = vld [vmem:[#allocation3] sm:$0xff]
    %v323 = vld [vmem:[#allocation3 + $0x8] sm:$0xff]
    %v324 = vld [vmem:[#allocation2] sm:$0xff]
    %v325 = vld [vmem:[#allocation2 + $0x8] sm:$0xff]
    %v326 = vld [vmem:[#allocation4] sm:$0xff]
    %v327 = vld [vmem:[#allocation4 + $0x8] sm:$0xff]
    %v328 = vld [vmem:[#allocation5] sm:$0xff]
    %v329 = vld [vmem:[#allocation5 + $0x8] sm:$0xff]
    %v330 = vlaneseq
    %v331 = vshrl.u32 %v330, 7
    %v332 = vsub.s32 0, %v331
    %v333 = vrot.slane %v322, %v332
    %v334 = vlaneseq
    %v335 = vshrl.u32 %v334, 7
    %v336 = vsub.s32 0, %v335
    %v337 = vrot.slane %v323, %v336
    %v338 = vmul.f32 %v333, %v321
    %v339 = vmul.f32 %v337, %v321
    %v340 = vmul.f32 %v338, 1.442695
    %v341 = vpow.pop %v340
    %v342 = vmul.f32 %v339, 1.442695
    %v343 = vpow.pop %v342
    %v344 = vlaneseq
    %v345 = vshrl.u32 %v344, 7
    %v346 = vsub.s32 0, %v345
    %v347 = vrot.slane %v326, %v346
    %349 = vbcast.lane.b32.xlu0 %v347, 256
    %v350 = vpop.permute.xlu0 %349
    %v351 = vlaneseq
    %v352 = vshrl.u32 %v351, 7
    %v353 = vsub.s32 0, %v352
    %v354 = vrot.slane %v327, %v353
    %356 = vbcast.lane.b32.xlu0 %v354, 256
    %v357 = vpop.permute.xlu0 %356
    %v358 = vmul.f32 %v322, %v324
    %v359 = vmul.f32 %v323, %v325
    %v360 = vlaneseq
    %v361 = vshrl.u32 %v360, 7
    %v362 = vsub.s32 0, %v361
    %v363 = vrot.slane %v358, %v362
    %v364 = vlaneseq
    %v365 = vshrl.u32 %v364, 7
    %v366 = vsub.s32 0, %v365
    %v367 = vrot.slane %v359, %v366
    %v368 = vmul.f32 %v350, %v363
    %v369 = vmul.f32 %v357, %v367
    %v370 = vmul.f32 %v341, 0.0
    %v371 = vmul.f32 %v343, 0.0
    %v372 = vadd.f32 %v370, %v368
    %v373 = vadd.f32 %v371, %v369
    %v374 = vlaneseq
    %v375 = vshrl.u32 %v374, 7
    %v376 = vsub.s32 0, %v375
    %v377 = vrot.slane %v328, %v376
    %379 = vbcast.lane.b32.xlu0 %v377, 256
    %v380 = vpop.permute.xlu0 %379
    %v381 = vlaneseq
    %v382 = vshrl.u32 %v381, 7
    %v383 = vsub.s32 0, %v382
    %v384 = vrot.slane %v329, %v383
    %386 = vbcast.lane.b32.xlu0 %v384, 256
    %v387 = vpop.permute.xlu0 %386
    %v388 = vmul.f32 %v372, %v380
    %v389 = vmul.f32 %v373, %v387
    %v390 = vsel %vm128, %v388, 0.0
    %v391 = vrot.slane %v390, 4
    %v392 = vadd.f32 %v390, %v391
    %v393 = vrot.slane %v392, 2
    %v394 = vadd.f32 %v392, %v393
    %v395 = vrot.slane %v394, 1
    %v396 = vadd.f32 %v394, %v395
    %v397 = vsel %vm128, %v389, 0.0
    %v398 = vrot.slane %v397, 4
    %v399 = vadd.f32 %v397, %v398
    %v400 = vrot.slane %v399, 2
    %v401 = vadd.f32 %v399, %v400
    %v402 = vrot.slane %v401, 1
    %v403 = vadd.f32 %v401, %v402
    %vm404 = vcmask 253952
    %405 = vst.msk [vmem:[#allocation6] sm:$0x1] %vm404, %v396
    %406 = vst.msk [vmem:[#allocation6 + $0x8] sm:$0x1] %vm404, %v403
    %v407 = vlaneseq
    %v408 = vshrl.u32 %v407, 7
    %v409 = vsub.s32 1, %v408
    %v410 = vrot.slane %v322, %v409
    %v411 = vlaneseq
    %v412 = vshrl.u32 %v411, 7
    %v413 = vsub.s32 1, %v412
    %v414 = vrot.slane %v323, %v413
    %v415 = vmul.f32 %v410, %v321
    %v416 = vmul.f32 %v414, %v321
    %v417 = vmul.f32 %v415, 1.442695
    %v418 = vpow.pop %v417
    %v419 = vmul.f32 %v416, 1.442695
    %v420 = vpow.pop %v419
    %v421 = vlaneseq
    %v422 = vshrl.u32 %v421, 7
    %v423 = vsub.s32 1, %v422
    %v424 = vrot.slane %v326, %v423
    %426 = vbcast.lane.b32.xlu0 %v424, 256
    %v427 = vpop.permute.xlu0 %426
    %v428 = vlaneseq
    %v429 = vshrl.u32 %v428, 7
    %v430 = vsub.s32 1, %v429
    %v431 = vrot.slane %v327, %v430
    %433 = vbcast.lane.b32.xlu0 %v431, 256
    %v434 = vpop.permute.xlu0 %433
    %v435 = vlaneseq
    %v436 = vshrl.u32 %v435, 7
    %v437 = vsub.s32 1, %v436
    %v438 = vrot.slane %v358, %v437
    %v439 = vlaneseq
    %v440 = vshrl.u32 %v439, 7
    %v441 = vsub.s32 1, %v440
    %v442 = vrot.slane %v359, %v441
    %v443 = vmul.f32 %v427, %v438
    %v444 = vmul.f32 %v434, %v442
    %v445 = vmul.f32 %v418, %v372
    %v446 = vmul.f32 %v420, %v373
    %v447 = vadd.f32 %v445, %v443
    %v448 = vadd.f32 %v446, %v444
    %v449 = vlaneseq
    %v450 = vshrl.u32 %v449, 7
    %v451 = vsub.s32 1, %v450
    %v452 = vrot.slane %v328, %v451
    %454 = vbcast.lane.b32.xlu0 %v452, 256
    %v455 = vpop.permute.xlu0 %454
    %v456 = vlaneseq
    %v457 = vshrl.u32 %v456, 7
    %v458 = vsub.s32 1, %v457
    %v459 = vrot.slane %v329, %v458
    %461 = vbcast.lane.b32.xlu0 %v459, 256
    %v462 = vpop.permute.xlu0 %461
    %v463 = vmul.f32 %v447, %v455
    %v464 = vmul.f32 %v448, %v462
    %v465 = vsel %vm128, %v463, 0.0
    %v466 = vrot.slane %v465, 4
    %v467 = vadd.f32 %v465, %v466
    %v468 = vrot.slane %v467, 2
    %v469 = vadd.f32 %v467, %v468
    %v470 = vrot.slane %v469, 1
    %v471 = vadd.f32 %v469, %v470
    %v472 = vsel %vm128, %v464, 0.0
    %v473 = vrot.slane %v472, 4
    %v474 = vadd.f32 %v472, %v473
    %v475 = vrot.slane %v474, 2
    %v476 = vadd.f32 %v474, %v475
    %v477 = vrot.slane %v476, 1
    %v478 = vadd.f32 %v476, %v477
    %s479 = sadd.s32 0, 1
    %s480 = scalar_lea.vmem [#allocation6], %s479
    %481 = vst.msk [vmem:[%s480] sm:$0x1] %vm404, %v471
    %482 = vst.msk [vmem:[%s480 + $0x8] sm:$0x1] %vm404, %v478
    %v483 = vlaneseq
    %v484 = vshrl.u32 %v483, 7
    %v485 = vsub.s32 2, %v484
    %v486 = vrot.slane %v322, %v485
    %v487 = vlaneseq
    %v488 = vshrl.u32 %v487, 7
    %v489 = vsub.s32 2, %v488
    %v490 = vrot.slane %v323, %v489
    %v491 = vmul.f32 %v486, %v321
    %v492 = vmul.f32 %v490, %v321
    %v493 = vmul.f32 %v491, 1.442695
    %v494 = vpow.pop %v493
    %v495 = vmul.f32 %v492, 1.442695
    %v496 = vpow.pop %v495
    %v497 = vlaneseq
    %v498 = vshrl.u32 %v497, 7
    %v499 = vsub.s32 2, %v498
    %v500 = vrot.slane %v326, %v499
    %502 = vbcast.lane.b32.xlu0 %v500, 256
    %v503 = vpop.permute.xlu0 %502
    %v504 = vlaneseq
    %v505 = vshrl.u32 %v504, 7
    %v506 = vsub.s32 2, %v505
    %v507 = vrot.slane %v327, %v506
    %509 = vbcast.lane.b32.xlu0 %v507, 256
    %v510 = vpop.permute.xlu0 %509
    %v511 = vlaneseq
    %v512 = vshrl.u32 %v511, 7
    %v513 = vsub.s32 2, %v512
    %v514 = vrot.slane %v358, %v513
    %v515 = vlaneseq
    %v516 = vshrl.u32 %v515, 7
    %v517 = vsub.s32 2, %v516
    %v518 = vrot.slane %v359, %v517
    %v519 = vmul.f32 %v503, %v514
    %v520 = vmul.f32 %v510, %v518
    %v521 = vmul.f32 %v494, %v447
    %v522 = vmul.f32 %v496, %v448
    %v523 = vadd.f32 %v521, %v519
    %v524 = vadd.f32 %v522, %v520
    %v525 = vlaneseq
    %v526 = vshrl.u32 %v525, 7
    %v527 = vsub.s32 2, %v526
    %v528 = vrot.slane %v328, %v527
    %530 = vbcast.lane.b32.xlu0 %v528, 256
    %v531 = vpop.permute.xlu0 %530
    %v532 = vlaneseq
    %v533 = vshrl.u32 %v532, 7
    %v534 = vsub.s32 2, %v533
    %v535 = vrot.slane %v329, %v534
    %537 = vbcast.lane.b32.xlu0 %v535, 256
    %v538 = vpop.permute.xlu0 %537
    %v539 = vmul.f32 %v523, %v531
    %v540 = vmul.f32 %v524, %v538
    %v541 = vsel %vm128, %v539, 0.0
    %v542 = vrot.slane %v541, 4
    %v543 = vadd.f32 %v541, %v542
    %v544 = vrot.slane %v543, 2
    %v545 = vadd.f32 %v543, %v544
    %v546 = vrot.slane %v545, 1
    %v547 = vadd.f32 %v545, %v546
    %v548 = vsel %vm128, %v540, 0.0
    %v549 = vrot.slane %v548, 4
    %v550 = vadd.f32 %v548, %v549
    %v551 = vrot.slane %v550, 2
    %v552 = vadd.f32 %v550, %v551
    %v553 = vrot.slane %v552, 1
    %v554 = vadd.f32 %v552, %v553
    %s555 = sadd.s32 0, 2
    %s556 = scalar_lea.vmem [#allocation6], %s555
    %557 = vst.msk [vmem:[%s556] sm:$0x1] %vm404, %v547
    %558 = vst.msk [vmem:[%s556 + $0x8] sm:$0x1] %vm404, %v554
    %v559 = vlaneseq
    %v560 = vshrl.u32 %v559, 7
    %v561 = vsub.s32 3, %v560
    %v562 = vrot.slane %v322, %v561
    %v563 = vlaneseq
    %v564 = vshrl.u32 %v563, 7
    %v565 = vsub.s32 3, %v564
    %v566 = vrot.slane %v323, %v565
    %v567 = vmul.f32 %v562, %v321
    %v568 = vmul.f32 %v566, %v321
    %v569 = vmul.f32 %v567, 1.442695
    %v570 = vpow.pop %v569
    %v571 = vmul.f32 %v568, 1.442695
    %v572 = vpow.pop %v571
    %v573 = vlaneseq
    %v574 = vshrl.u32 %v573, 7
    %v575 = vsub.s32 3, %v574
    %v576 = vrot.slane %v326, %v575
    %578 = vbcast.lane.b32.xlu0 %v576, 256
    %v579 = vpop.permute.xlu0 %578
    %v580 = vlaneseq
    %v581 = vshrl.u32 %v580, 7
    %v582 = vsub.s32 3, %v581
    %v583 = vrot.slane %v327, %v582
    %585 = vbcast.lane.b32.xlu0 %v583, 256
    %v586 = vpop.permute.xlu0 %585
    %v587 = vlaneseq
    %v588 = vshrl.u32 %v587, 7
    %v589 = vsub.s32 3, %v588
    %v590 = vrot.slane %v358, %v589
    %v591 = vlaneseq
    %v592 = vshrl.u32 %v591, 7
    %v593 = vsub.s32 3, %v592
    %v594 = vrot.slane %v359, %v593
    %v595 = vmul.f32 %v579, %v590
    %v596 = vmul.f32 %v586, %v594
    %v597 = vmul.f32 %v570, %v523
    %v598 = vmul.f32 %v572, %v524
    %v599 = vadd.f32 %v597, %v595
    %v600 = vadd.f32 %v598, %v596
    %v601 = vlaneseq
    %v602 = vshrl.u32 %v601, 7
    %v603 = vsub.s32 3, %v602
    %v604 = vrot.slane %v328, %v603
    %606 = vbcast.lane.b32.xlu0 %v604, 256
    %v607 = vpop.permute.xlu0 %606
    %v608 = vlaneseq
    %v609 = vshrl.u32 %v608, 7
    %v610 = vsub.s32 3, %v609
    %v611 = vrot.slane %v329, %v610
    %613 = vbcast.lane.b32.xlu0 %v611, 256
    %v614 = vpop.permute.xlu0 %613
    %v615 = vmul.f32 %v599, %v607
    %v616 = vmul.f32 %v600, %v614
    %v617 = vsel %vm128, %v615, 0.0
    %v618 = vrot.slane %v617, 4
    %v619 = vadd.f32 %v617, %v618
    %v620 = vrot.slane %v619, 2
    %v621 = vadd.f32 %v619, %v620
    %v622 = vrot.slane %v621, 1
    %v623 = vadd.f32 %v621, %v622
    %v624 = vsel %vm128, %v616, 0.0
    %v625 = vrot.slane %v624, 4
    %v626 = vadd.f32 %v624, %v625
    %v627 = vrot.slane %v626, 2
    %v628 = vadd.f32 %v626, %v627
    %v629 = vrot.slane %v628, 1
    %v630 = vadd.f32 %v628, %v629
    %s631 = sadd.s32 0, 3
    %s632 = scalar_lea.vmem [#allocation6], %s631
    %633 = vst.msk [vmem:[%s632] sm:$0x1] %vm404, %v623
    %634 = vst.msk [vmem:[%s632 + $0x8] sm:$0x1] %vm404, %v630
    %v635 = vlaneseq
    %v636 = vshrl.u32 %v635, 7
    %v637 = vsub.s32 4, %v636
    %v638 = vrot.slane %v322, %v637
    %v639 = vlaneseq
    %v640 = vshrl.u32 %v639, 7
    %v641 = vsub.s32 4, %v640
    %v642 = vrot.slane %v323, %v641
    %v643 = vmul.f32 %v638, %v321
    %v644 = vmul.f32 %v642, %v321
    %v645 = vmul.f32 %v643, 1.442695
    %v646 = vpow.pop %v645
    %v647 = vmul.f32 %v644, 1.442695
    %v648 = vpow.pop %v647
    %v649 = vlaneseq
    %v650 = vshrl.u32 %v649, 7
    %v651 = vsub.s32 4, %v650
    %v652 = vrot.slane %v326, %v651
    %654 = vbcast.lane.b32.xlu0 %v652, 256
    %v655 = vpop.permute.xlu0 %654
    %v656 = vlaneseq
    %v657 = vshrl.u32 %v656, 7
    %v658 = vsub.s32 4, %v657
    %v659 = vrot.slane %v327, %v658
    %661 = vbcast.lane.b32.xlu0 %v659, 256
    %v662 = vpop.permute.xlu0 %661
    %v663 = vlaneseq
    %v664 = vshrl.u32 %v663, 7
    %v665 = vsub.s32 4, %v664
    %v666 = vrot.slane %v358, %v665
    %v667 = vlaneseq
    %v668 = vshrl.u32 %v667, 7
    %v669 = vsub.s32 4, %v668
    %v670 = vrot.slane %v359, %v669
    %v671 = vmul.f32 %v655, %v666
    %v672 = vmul.f32 %v662, %v670
    %v673 = vmul.f32 %v646, %v599
    %v674 = vmul.f32 %v648, %v600
    %v675 = vadd.f32 %v673, %v671
    %v676 = vadd.f32 %v674, %v672
    %v677 = vlaneseq
    %v678 = vshrl.u32 %v677, 7
    %v679 = vsub.s32 4, %v678
    %v680 = vrot.slane %v328, %v679
    %682 = vbcast.lane.b32.xlu0 %v680, 256
    %v683 = vpop.permute.xlu0 %682
    %v684 = vlaneseq
    %v685 = vshrl.u32 %v684, 7
    %v686 = vsub.s32 4, %v685
    %v687 = vrot.slane %v329, %v686
    %689 = vbcast.lane.b32.xlu0 %v687, 256
    %v690 = vpop.permute.xlu0 %689
    %v691 = vmul.f32 %v675, %v683
    %v692 = vmul.f32 %v676, %v690
    %v693 = vsel %vm128, %v691, 0.0
    %v694 = vrot.slane %v693, 4
    %v695 = vadd.f32 %v693, %v694
    %v696 = vrot.slane %v695, 2
    %v697 = vadd.f32 %v695, %v696
    %v698 = vrot.slane %v697, 1
    %v699 = vadd.f32 %v697, %v698
    %v700 = vsel %vm128, %v692, 0.0
    %v701 = vrot.slane %v700, 4
    %v702 = vadd.f32 %v700, %v701
    %v703 = vrot.slane %v702, 2
    %v704 = vadd.f32 %v702, %v703
    %v705 = vrot.slane %v704, 1
    %v706 = vadd.f32 %v704, %v705
    %s707 = sadd.s32 0, 4
    %s708 = scalar_lea.vmem [#allocation6], %s707
    %709 = vst.msk [vmem:[%s708] sm:$0x1] %vm404, %v699
    %710 = vst.msk [vmem:[%s708 + $0x8] sm:$0x1] %vm404, %v706
    %v711 = vlaneseq
    %v712 = vshrl.u32 %v711, 7
    %v713 = vsub.s32 5, %v712
    %v714 = vrot.slane %v322, %v713
    %v715 = vlaneseq
    %v716 = vshrl.u32 %v715, 7
    %v717 = vsub.s32 5, %v716
    %v718 = vrot.slane %v323, %v717
    %v719 = vmul.f32 %v714, %v321
    %v720 = vmul.f32 %v718, %v321
    %v721 = vmul.f32 %v719, 1.442695
    %v722 = vpow.pop %v721
    %v723 = vmul.f32 %v720, 1.442695
    %v724 = vpow.pop %v723
    %v725 = vlaneseq
    %v726 = vshrl.u32 %v725, 7
    %v727 = vsub.s32 5, %v726
    %v728 = vrot.slane %v326, %v727
    %730 = vbcast.lane.b32.xlu0 %v728, 256
    %v731 = vpop.permute.xlu0 %730
    %v732 = vlaneseq
    %v733 = vshrl.u32 %v732, 7
    %v734 = vsub.s32 5, %v733
    %v735 = vrot.slane %v327, %v734
    %737 = vbcast.lane.b32.xlu0 %v735, 256
    %v738 = vpop.permute.xlu0 %737
    %v739 = vlaneseq
    %v740 = vshrl.u32 %v739, 7
    %v741 = vsub.s32 5, %v740
    %v742 = vrot.slane %v358, %v741
    %v743 = vlaneseq
    %v744 = vshrl.u32 %v743, 7
    %v745 = vsub.s32 5, %v744
    %v746 = vrot.slane %v359, %v745
    %v747 = vmul.f32 %v731, %v742
    %v748 = vmul.f32 %v738, %v746
    %v749 = vmul.f32 %v722, %v675
    %v750 = vmul.f32 %v724, %v676
    %v751 = vadd.f32 %v749, %v747
    %v752 = vadd.f32 %v750, %v748
    %v753 = vlaneseq
    %v754 = vshrl.u32 %v753, 7
    %v755 = vsub.s32 5, %v754
    %v756 = vrot.slane %v328, %v755
    %758 = vbcast.lane.b32.xlu0 %v756, 256
    %v759 = vpop.permute.xlu0 %758
    %v760 = vlaneseq
    %v761 = vshrl.u32 %v760, 7
    %v762 = vsub.s32 5, %v761
    %v763 = vrot.slane %v329, %v762
    %765 = vbcast.lane.b32.xlu0 %v763, 256
    %v766 = vpop.permute.xlu0 %765
    %v767 = vmul.f32 %v751, %v759
    %v768 = vmul.f32 %v752, %v766
    %v769 = vsel %vm128, %v767, 0.0
    %v770 = vrot.slane %v769, 4
    %v771 = vadd.f32 %v769, %v770
    %v772 = vrot.slane %v771, 2
    %v773 = vadd.f32 %v771, %v772
    %v774 = vrot.slane %v773, 1
    %v775 = vadd.f32 %v773, %v774
    %v776 = vsel %vm128, %v768, 0.0
    %v777 = vrot.slane %v776, 4
    %v778 = vadd.f32 %v776, %v777
    %v779 = vrot.slane %v778, 2
    %v780 = vadd.f32 %v778, %v779
    %v781 = vrot.slane %v780, 1
    %v782 = vadd.f32 %v780, %v781
    %s783 = sadd.s32 0, 5
    %s784 = scalar_lea.vmem [#allocation6], %s783
    %785 = vst.msk [vmem:[%s784] sm:$0x1] %vm404, %v775
    %786 = vst.msk [vmem:[%s784 + $0x8] sm:$0x1] %vm404, %v782
    %v787 = vlaneseq
    %v788 = vshrl.u32 %v787, 7
    %v789 = vsub.s32 6, %v788
    %v790 = vrot.slane %v322, %v789
    %v791 = vlaneseq
    %v792 = vshrl.u32 %v791, 7
    %v793 = vsub.s32 6, %v792
    %v794 = vrot.slane %v323, %v793
    %v795 = vmul.f32 %v790, %v321
    %v796 = vmul.f32 %v794, %v321
    %v797 = vmul.f32 %v795, 1.442695
    %v798 = vpow.pop %v797
    %v799 = vmul.f32 %v796, 1.442695
    %v800 = vpow.pop %v799
    %v801 = vlaneseq
    %v802 = vshrl.u32 %v801, 7
    %v803 = vsub.s32 6, %v802
    %v804 = vrot.slane %v326, %v803
    %806 = vbcast.lane.b32.xlu0 %v804, 256
    %v807 = vpop.permute.xlu0 %806
    %v808 = vlaneseq
    %v809 = vshrl.u32 %v808, 7
    %v810 = vsub.s32 6, %v809
    %v811 = vrot.slane %v327, %v810
    %813 = vbcast.lane.b32.xlu0 %v811, 256
    %v814 = vpop.permute.xlu0 %813
    %v815 = vlaneseq
    %v816 = vshrl.u32 %v815, 7
    %v817 = vsub.s32 6, %v816
    %v818 = vrot.slane %v358, %v817
    %v819 = vlaneseq
    %v820 = vshrl.u32 %v819, 7
    %v821 = vsub.s32 6, %v820
    %v822 = vrot.slane %v359, %v821
    %v823 = vmul.f32 %v807, %v818
    %v824 = vmul.f32 %v814, %v822
    %v825 = vmul.f32 %v798, %v751
    %v826 = vmul.f32 %v800, %v752
    %v827 = vadd.f32 %v825, %v823
    %v828 = vadd.f32 %v826, %v824
    %v829 = vlaneseq
    %v830 = vshrl.u32 %v829, 7
    %v831 = vsub.s32 6, %v830
    %v832 = vrot.slane %v328, %v831
    %834 = vbcast.lane.b32.xlu0 %v832, 256
    %v835 = vpop.permute.xlu0 %834
    %v836 = vlaneseq
    %v837 = vshrl.u32 %v836, 7
    %v838 = vsub.s32 6, %v837
    %v839 = vrot.slane %v329, %v838
    %841 = vbcast.lane.b32.xlu0 %v839, 256
    %v842 = vpop.permute.xlu0 %841
    %v843 = vmul.f32 %v827, %v835
    %v844 = vmul.f32 %v828, %v842
    %v845 = vsel %vm128, %v843, 0.0
    %v846 = vrot.slane %v845, 4
    %v847 = vadd.f32 %v845, %v846
    %v848 = vrot.slane %v847, 2
    %v849 = vadd.f32 %v847, %v848
    %v850 = vrot.slane %v849, 1
    %v851 = vadd.f32 %v849, %v850
    %v852 = vsel %vm128, %v844, 0.0
    %v853 = vrot.slane %v852, 4
    %v854 = vadd.f32 %v852, %v853
    %v855 = vrot.slane %v854, 2
    %v856 = vadd.f32 %v854, %v855
    %v857 = vrot.slane %v856, 1
    %v858 = vadd.f32 %v856, %v857
    %s859 = sadd.s32 0, 6
    %s860 = scalar_lea.vmem [#allocation6], %s859
    %861 = vst.msk [vmem:[%s860] sm:$0x1] %vm404, %v851
    %862 = vst.msk [vmem:[%s860 + $0x8] sm:$0x1] %vm404, %v858
    %v863 = vlaneseq
    %v864 = vshrl.u32 %v863, 7
    %v865 = vsub.s32 7, %v864
    %v866 = vrot.slane %v322, %v865
    %v867 = vlaneseq
    %v868 = vshrl.u32 %v867, 7
    %v869 = vsub.s32 7, %v868
    %v870 = vrot.slane %v323, %v869
    %v871 = vmul.f32 %v866, %v321
    %v872 = vmul.f32 %v870, %v321
    %v873 = vmul.f32 %v871, 1.442695
    %v874 = vpow.pop %v873
    %v875 = vmul.f32 %v872, 1.442695
    %v876 = vpow.pop %v875
    %v877 = vlaneseq
    %v878 = vshrl.u32 %v877, 7
    %v879 = vsub.s32 7, %v878
    %v880 = vrot.slane %v326, %v879
    %882 = vbcast.lane.b32.xlu0 %v880, 256
    %v883 = vpop.permute.xlu0 %882
    %v884 = vlaneseq
    %v885 = vshrl.u32 %v884, 7
    %v886 = vsub.s32 7, %v885
    %v887 = vrot.slane %v327, %v886
    %889 = vbcast.lane.b32.xlu0 %v887, 256
    %v890 = vpop.permute.xlu0 %889
    %v891 = vlaneseq
    %v892 = vshrl.u32 %v891, 7
    %v893 = vsub.s32 7, %v892
    %v894 = vrot.slane %v358, %v893
    %v895 = vlaneseq
    %v896 = vshrl.u32 %v895, 7
    %v897 = vsub.s32 7, %v896
    %v898 = vrot.slane %v359, %v897
    %v899 = vmul.f32 %v883, %v894
    %v900 = vmul.f32 %v890, %v898
    %v901 = vmul.f32 %v874, %v827
    %v902 = vmul.f32 %v876, %v828
    %v903 = vadd.f32 %v901, %v899
    %v904 = vadd.f32 %v902, %v900
    %v905 = vlaneseq
    %v906 = vshrl.u32 %v905, 7
    %v907 = vsub.s32 7, %v906
    %v908 = vrot.slane %v328, %v907
    %910 = vbcast.lane.b32.xlu0 %v908, 256
    %v911 = vpop.permute.xlu0 %910
    %v912 = vlaneseq
    %v913 = vshrl.u32 %v912, 7
    %v914 = vsub.s32 7, %v913
    %v915 = vrot.slane %v329, %v914
    %917 = vbcast.lane.b32.xlu0 %v915, 256
    %v918 = vpop.permute.xlu0 %917
    %v919 = vmul.f32 %v903, %v911
    %v920 = vmul.f32 %v904, %v918
    %v921 = vsel %vm128, %v919, 0.0
    %v922 = vrot.slane %v921, 4
    %v923 = vadd.f32 %v921, %v922
    %v924 = vrot.slane %v923, 2
    %v925 = vadd.f32 %v923, %v924
    %v926 = vrot.slane %v925, 1
    %v927 = vadd.f32 %v925, %v926
    %v928 = vsel %vm128, %v920, 0.0
    %v929 = vrot.slane %v928, 4
    %v930 = vadd.f32 %v928, %v929
    %v931 = vrot.slane %v930, 2
    %v932 = vadd.f32 %v930, %v931
    %v933 = vrot.slane %v932, 1
    %v934 = vadd.f32 %v932, %v933
    %s935 = sadd.s32 0, 7
    %s936 = scalar_lea.vmem [#allocation6], %s935
    %937 = vst.msk [vmem:[%s936] sm:$0x1] %vm404, %v927
    %938 = vst.msk [vmem:[%s936 + $0x8] sm:$0x1] %vm404, %v934
    %v939 = vld [vmem:[#allocation6] sm:$0xff]
    %v940 = vld [vmem:[#allocation6 + $0x8] sm:$0xff]
    %v941 = vld [vmem:[#allocation15] sm:$0x1]
    %v942 = vld [vmem:[#allocation2] sm:$0xff]
    %v943 = vld [vmem:[#allocation2 + $0x8] sm:$0xff]
    %v945 = vlaneseq
    %v946 = vshrl.u32 %v945, 7
    %v947 = vsub.s32 0, %v946
    %v948 = vrot.slane %v941, %v947
    %v950 = vmul.f32 %v948, %v942
    %v951 = vmul.f32 %v948, %v943
    %v952 = vadd.f32 %v939, %v950
    %v953 = vadd.f32 %v940, %v951
    %v954 = vmul.f32 %v952, 0.5
    %v955 = vmul.f32 %v953, 0.5
    %v956 = vmul.f32 %v952, 0.70710677
    %v957 = vmul.f32 %v953, 0.70710677
    %v958 = verf.f32.pop %v956
    %v959 = verf.f32.pop %v957
    %v960 = vadd.f32 %v958, 1.0
    %v961 = vadd.f32 %v959, 1.0
    %v962 = vmul.f32 %v954, %v960
    %v963 = vmul.f32 %v955, %v961
    %v964 = vld [vmem:[#allocation16] sm:$0xff]
    %v965 = vld [vmem:[#allocation16 + $0x8] sm:$0xff]
    %v966 = vld [vmem:[#allocation16 + $0x10] sm:$0xff]
    %v967 = vld [vmem:[#allocation16 + $0x18] sm:$0xff]
    %v968 = vld [vmem:[#allocation18] sm:$0x1]
    %v970 = vlaneseq
    %v971 = vshrl.u32 %v970, 7
    %v972 = vsub.s32 0, %v971
    %v973 = vrot.slane %v968, %v972
    %v976 = vsel %vm128, %v962, 0
    %v979 = vsel %vm128, %v963, 0
    %981 = vmatprep.subr.mxu0 0.0
    %982 = vmatpush1.msra.mxu0 %v964
    %983 = vmatprep.subr.mxu0 0.0
    %984 = vmatpush1.msra.mxu0 %v965
    %985 = vmatprep.subr.mxu0 0.0
    %986 = vmatpush1.msra.mxu0 %v966
    %987 = vmatprep.subr.mxu0 0.0
    %988 = vmatpush1.msra.mxu0 %v967
    %989 = vmatprep.subr.mxu0 0.0
    %990 = vmatpush1.msra.mxu0 0.0
    %991 = vmatprep.subr.mxu0 0.0
    %992 = vmatpush1.msra.mxu0 0.0
    %993 = vmatprep.subr.mxu0 0.0
    %994 = vmatpush1.msra.mxu0 0.0
    %995 = vmatprep.subr.mxu0 0.0
    %996 = vmatpush1.msra.mxu0 0.0
    %997 = vmatprep.subr.mxu0 0.0
    %998 = vmatpush1.msra.mxu0 0.0
    %999 = vmatprep.subr.mxu0 0.0
    %1000 = vmatpush1.msra.mxu0 0.0
    %1001 = vmatprep.subr.mxu0 0.0
    %1002 = vmatpush1.msra.mxu0 0.0
    %1003 = vmatprep.subr.mxu0 0.0
    %1004 = vmatpush1.msra.mxu0 0.0
    %1005 = vmatprep.subr.mxu0 0.0
    %1006 = vmatpush1.msra.mxu0 0.0
    %1007 = vmatprep.subr.mxu0 0.0
    %1008 = vmatpush1.msra.mxu0 0.0
    %1009 = vmatprep.subr.mxu0 0.0
    %1010 = vmatpush1.msra.mxu0 0.0
    %1011 = vmatprep.subr.mxu0 0.0
    %1012 = vmatpush1.msra.mxu0 0.0
    %1013 = vmatprep.subr.mxu0 0.0
    %1014 = vmatpush1.msra.mxu0 0.0
    %1015 = vmatprep.subr.mxu0 0.0
    %1016 = vmatpush1.msra.mxu0 0.0
    %1017 = vmatprep.subr.mxu0 0.0
    %1018 = vmatpush1.msra.mxu0 0.0
    %1019 = vmatprep.subr.mxu0 0.0
    %1020 = vmatpush1.msra.mxu0 0.0
    %1021 = vmatprep.subr.mxu0 0.0
    %1022 = vmatpush1.msra.mxu0 0.0
    %1023 = vmatprep.subr.mxu0 0.0
    %1024 = vmatpush1.msra.mxu0 0.0
    %1025 = vmatprep.subr.mxu0 0.0
    %1026 = vmatpush1.msra.mxu0 0.0
    %1027 = vmatprep.subr.mxu0 0.0
    %1028 = vmatpush1.msra.mxu0 0.0
    %1029 = vmatprep.subr.mxu0 0.0
    %1030 = vmatpush1.msra.mxu0 0.0
    %1031 = vmatprep.subr.mxu0 0.0
    %1032 = vmatpush1.msra.mxu0 0.0
    %1033 = vmatprep.subr.mxu0 0.0
    %1034 = vmatpush1.msra.mxu0 0.0
    %1035 = vmatprep.subr.mxu0 0.0
    %1036 = vmatpush1.msra.mxu0 0.0
    %1037 = vmatprep.subr.mxu0 0.0
    %1038 = vmatpush1.msra.mxu0 0.0
    %1039 = vmatprep.subr.mxu0 0.0
    %1040 = vmatpush1.msra.mxu0 0.0
    %1041 = vmatprep.subr.mxu0 0.0
    %1042 = vmatpush1.msra.mxu0 0.0
    %1043 = vmatprep.subr.mxu0 0.0
    %1044 = vmatpush1.msra.mxu0 0.0
    %1045 = vmatprep.mubr.f32.mxu0 0.0
    %1046 = vmatmul.mubr.f32.gmra.mrb[0].mxu0 %v976
    %v1047 = vpop.f32.mrb[0].mxu0
    %v1048 = vadd.f32 %v973, %v1047
    %v1049 = vpop.f32.mrb[0].mxu0
    %1050 = vmatprep.mubr.f32.mxu0 0.0
    %1051 = vmatmul.mubr.f32.gmra.mrb[0].mxu0 %v979
    %v1052 = vpop.f32.mrb[0].mxu0
    %v1053 = vadd.f32 %v973, %v1052
    %v1054 = vpop.f32.mrb[0].mxu0
    %1055 = vdwg.mxu0
    %v1056 = vld [vmem:[%s9] sm:$0xff]
    %v1057 = vld [vmem:[%s9 + $0x8] sm:$0xff]
    %v1058 = vld [vmem:[%s9 + $0x10] sm:$0xff]
    %v1059 = vld [vmem:[%s9 + $0x18] sm:$0xff]
    %v1060 = vld [vmem:[%s10] sm:$0x1]
    %v1062 = vlaneseq
    %v1063 = vshrl.u32 %v1062, 7
    %v1064 = vsub.s32 0, %v1063
    %v1065 = vrot.slane %v1060, %v1064
    %1067 = vmatprep.subr.mxu0 0.0
    %1068 = vmatpush1.msra.mxu0 %v1056
    %1069 = vmatprep.subr.mxu0 0.0
    %1070 = vmatpush1.msra.mxu0 %v1057
    %1071 = vmatprep.subr.mxu0 0.0
    %1072 = vmatpush1.msra.mxu0 %v1058
    %1073 = vmatprep.subr.mxu0 0.0
    %1074 = vmatpush1.msra.mxu0 %v1059
    %1075 = vmatprep.subr.mxu0 0.0
    %1076 = vmatpush1.msra.mxu0 0.0
    %1077 = vmatprep.subr.mxu0 0.0
    %1078 = vmatpush1.msra.mxu0 0.0
    %1079 = vmatprep.subr.mxu0 0.0
    %1080 = vmatpush1.msra.mxu0 0.0
    %1081 = vmatprep.subr.mxu0 0.0
    %1082 = vmatpush1.msra.mxu0 0.0
    %1083 = vmatprep.subr.mxu0 0.0
    %1084 = vmatpush1.msra.mxu0 0.0
    %1085 = vmatprep.subr.mxu0 0.0
    %1086 = vmatpush1.msra.mxu0 0.0
    %1087 = vmatprep.subr.mxu0 0.0
    %1088 = vmatpush1.msra.mxu0 0.0
    %1089 = vmatprep.subr.mxu0 0.0
    %1090 = vmatpush1.msra.mxu0 0.0
    %1091 = vmatprep.subr.mxu0 0.0
    %1092 = vmatpush1.msra.mxu0 0.0
    %1093 = vmatprep.subr.mxu0 0.0
    %1094 = vmatpush1.msra.mxu0 0.0
    %1095 = vmatprep.subr.mxu0 0.0
    %1096 = vmatpush1.msra.mxu0 0.0
    %1097 = vmatprep.subr.mxu0 0.0
    %1098 = vmatpush1.msra.mxu0 0.0
    %1099 = vmatprep.subr.mxu0 0.0
    %1100 = vmatpush1.msra.mxu0 0.0
    %1101 = vmatprep.subr.mxu0 0.0
    %1102 = vmatpush1.msra.mxu0 0.0
    %1103 = vmatprep.subr.mxu0 0.0
    %1104 = vmatpush1.msra.mxu0 0.0
    %1105 = vmatprep.subr.mxu0 0.0
    %1106 = vmatpush1.msra.mxu0 0.0
    %1107 = vmatprep.subr.mxu0 0.0
    %1108 = vmatpush1.msra.mxu0 0.0
    %1109 = vmatprep.subr.mxu0 0.0
    %1110 = vmatpush1.msra.mxu0 0.0
    %1111 = vmatprep.subr.mxu0 0.0
    %1112 = vmatpush1.msra.mxu0 0.0
    %1113 = vmatprep.subr.mxu0 0.0
    %1114 = vmatpush1.msra.mxu0 0.0
    %1115 = vmatprep.subr.mxu0 0.0
    %1116 = vmatpush1.msra.mxu0 0.0
    %1117 = vmatprep.subr.mxu0 0.0
    %1118 = vmatpush1.msra.mxu0 0.0
    %1119 = vmatprep.subr.mxu0 0.0
    %1120 = vmatpush1.msra.mxu0 0.0
    %1121 = vmatprep.subr.mxu0 0.0
    %1122 = vmatpush1.msra.mxu0 0.0
    %1123 = vmatprep.subr.mxu0 0.0
    %1124 = vmatpush1.msra.mxu0 0.0
    %1125 = vmatprep.subr.mxu0 0.0
    %1126 = vmatpush1.msra.mxu0 0.0
    %1127 = vmatprep.subr.mxu0 0.0
    %1128 = vmatpush1.msra.mxu0 0.0
    %1129 = vmatprep.subr.mxu0 0.0
    %1130 = vmatpush1.msra.mxu0 0.0
    %1131 = vmatprep.mubr.f32.mxu0 0.0
    %1132 = vmatmul.mubr.f32.gmra.mrb[0].mxu0 %v976
    %v1133 = vpop.f32.mrb[0].mxu0
    %v1134 = vadd.f32 %v1065, %v1133
    %v1135 = vpop.f32.mrb[0].mxu0
    %1136 = vmatprep.mubr.f32.mxu0 0.0
    %1137 = vmatmul.mubr.f32.gmra.mrb[0].mxu0 %v979
    %v1138 = vpop.f32.mrb[0].mxu0
    %v1139 = vadd.f32 %v1065, %v1138
    %v1140 = vpop.f32.mrb[0].mxu0
    %1141 = vdwg.mxu0
    %v1142 = vxor.u32 %v1134, 2147483648
    %v1143 = vxor.u32 %v1139, 2147483648
    %v1144 = vmul.f32 %v1142, 1.442695
    %v1145 = vpow.pop %v1144
    %v1146 = vmul.f32 %v1143, 1.442695
    %v1147 = vpow.pop %v1146
    %v1148 = vadd.f32 %v1145, 1.0
    %v1149 = vadd.f32 %v1147, 1.0
    %v1150 = vrcp.pop %v1148
    %v1151 = vmul.f32 1.0, %v1150
    %v1152 = vrcp.pop %v1149
    %v1153 = vmul.f32 1.0, %v1152
    %v1154 = vmul.f32 %v1048, %v1151
    %v1155 = vmul.f32 %v1053, %v1153
    %v1156 = vld [vmem:[#allocation7] sm:$0xff]
    %v1157 = vld [vmem:[#allocation7 + $0x8] sm:$0xff]
    %v1158 = vadd.f32 %v1154, %v1156
    %v1159 = vadd.f32 %v1155, %v1157
    %1160 = vst.msk [vmem:[#allocation19] sm:$0xff] %vm128, %v1158
    %1161 = vst.msk [vmem:[#allocation19 + $0x8] sm:$0xff] %vm128, %v1159
    // Predicated region
    $region74: #{tpu_custom_call.1} parent=1 // pred_check
      _
    $region75: #{tpu_custom_call.1} parent=1 // pred_check_branch
      %1163 = sbr.rel (0) target = $region77
    $region76: #{tpu_custom_call.1} parent=1 // pred_region
      %s1165 = ssub.s32 256, 256
      %1166 = vsyncadd [#allocation9], %s1165
      %s1167 = sshll.u32 [#allocation19], 4
      %s1168 = int_to_ptr.vmem [resolvable:$true] %s1167
      %1173 = dma.vmem_to_hbm [thread:$0]  %s1168, 256, %s11, [#allocation9], 128, 128, 8
    $region77: #{tpu_custom_call.1} parent=1 // pred_fallthru
      _
    // Predicated region
    $region78: #{tpu_custom_call.1} parent=1 // pred_check
      _
    $region79: #{tpu_custom_call.1} parent=1 // pred_check_branch
      %1175 = sbr.rel (0) target = $region81
    $region80: #{tpu_custom_call.1} parent=1 // pred_region
      %1176 = dma.done [#allocation9], 256
    $region81: #{tpu_custom_call.1} parent=1 // pred_fallthru
      _
    %1177 = vsyncpa [#allocation8], 1
    %1178 = vsyncpa [#allocation11], 1
    %1179 = vsyncpa [#allocation14], 1
    %1180 = vsyncpa [#allocation17], 1
    %1181 = vsyncpa [#allocation9], 1

</llo_original>
